<compile_context>
chip_gen: v5e
topology: v5e:2x2
jax: 0.10.0
libtpu: 0.0.40
codegen_flags: <defaults>
</compile_context>

<pallas_src>
import functools

import jax
import jax.numpy as jnp
from jax.experimental import pallas as pl
from jax.experimental.pallas import tpu as pltpu

LEAK = 0.2
BN_EPS = 1e-5


def _leaky_relu(x, slope=LEAK):
    return jnp.where(x > 0, x, slope * x)


def _conv1(x, w1, b1):
    # x: (Cin, TP), w1: (ndf, Cin), b1: (ndf, 1)  ->  (ndf, TP)
    # K = Cin is tiny, so do it as Cin broadcast-FMAs on the VPU instead of a
    # K=4 MXU matmul.
    cin = x.shape[0]
    h = b1 + w1[:, 0:1] * x[0:1, :]
    for k in range(1, cin):
        h = h + w1[:, k:k + 1] * x[k:k + 1, :]
    return h


def _stats_kernel(x_ref, w1_ref, b1_ref, w2_ref, gamma_ref, beta_ref,
                  scale_ref, shift_ref, *, n_valid, tp):
    """Pass 1: accumulate per-channel sum / sumsq of h2, fold BN at the end.

    scale_ref / shift_ref double as the running sum / sum-of-squares
    accumulators until the final grid step, at which point they are
    overwritten with the folded BN scale / shift.
    """
    i = pl.program_id(0)

    @pl.when(i == 0)
    def _():
        scale_ref[...] = jnp.zeros_like(scale_ref)
        shift_ref[...] = jnp.zeros_like(shift_ref)

    x = x_ref[...].astype(jnp.float32)                         # (Cin, TP)
    h1 = _leaky_relu(_conv1(x, w1_ref[...], b1_ref[...]))      # (ndf, TP)
    h2 = jnp.dot(w2_ref[...], h1,
                 preferred_element_type=jnp.float32)           # (2ndf, TP)

    # Mask out padded pixel columns (global column index >= true pixel count).
    col = jax.lax.broadcasted_iota(jnp.int32, (1, tp), 1) + i * tp
    valid = (col < n_valid).astype(jnp.float32)                # (1, TP)
    h2 = h2 * valid

    scale_ref[...] += jnp.sum(h2, axis=1, keepdims=True)       # running sum
    shift_ref[...] += jnp.sum(h2 * h2, axis=1, keepdims=True)  # running sumsq

    @pl.when(i == pl.num_programs(0) - 1)
    def _():
        inv_n = jnp.float32(1.0 / n_valid)
        mean = scale_ref[...] * inv_n
        var = shift_ref[...] * inv_n - mean * mean             # biased var
        scale = gamma_ref[...] * jax.lax.rsqrt(var + BN_EPS)
        scale_ref[...] = scale
        shift_ref[...] = beta_ref[...] - mean * scale


def _apply_kernel(x_ref, w1_ref, b1_ref, w2_ref, scale_ref, shift_ref,
                  w3_ref, out_ref):
    """Pass 2: recompute conv1/conv2, folded BN + LeakyReLU, conv3."""
    x = x_ref[...].astype(jnp.float32)                         # (Cin, TP)
    h1 = _leaky_relu(_conv1(x, w1_ref[...], b1_ref[...]))      # (ndf, TP)
    h2 = jnp.dot(w2_ref[...], h1,
                 preferred_element_type=jnp.float32)           # (2ndf, TP)
    h3 = _leaky_relu(h2 * scale_ref[...] + shift_ref[...])     # BN as one FMA
    # conv3 (2ndf -> 1): VPU multiply + cross-sublane (XLU) reduce.
    out_ref[...] = jnp.sum(h3 * w3_ref[...], axis=0,
                           keepdims=True).astype(out_ref.dtype)


def _round_up(x, m):
    return ((x + m - 1) // m) * m


def pixel_discriminator(x_nchw, params, *, tile_pixels=2048):
    """x_nchw: (N, Cin, H, W) float32.  Returns (N, 1, H, W) float32."""
    N, Cin, H, W = x_nchw.shape
    P = N * H * W
    w1, b1, w2, gamma, beta, w3 = params
    ndf = w1.shape[0]
    ndf2 = w2.shape[0]

    # Channels-first flattened pixels: (Cin, P) -> pixels on the lane axis.
    x_cf = jnp.transpose(x_nchw, (1, 0, 2, 3)).reshape(Cin, P)

    # Pixel-tile size: multiple of 128, capped at tile_pixels.
    tp = min(max(128, (tile_pixels // 128) * 128), _round_up(P, 128))
    p_pad = _round_up(P, tp)
    if p_pad != P:
        x_cf = jnp.pad(x_cf, ((0, 0), (0, p_pad - P)))
    num_tiles = p_pad // tp

    const = lambda i: (0, 0)
    x_spec = pl.BlockSpec((Cin, tp), lambda i: (0, i))
    weight_specs = [
        pl.BlockSpec((ndf, Cin), const),    # w1  (resident)
        pl.BlockSpec((ndf, 1), const),      # b1
        pl.BlockSpec((ndf2, ndf), const),   # w2
    ]
    vec_spec = pl.BlockSpec((ndf2, 1), const)

    # Pass 1: BatchNorm statistics -> folded per-channel scale / shift.
    scale, shift = pl.pallas_call(
        functools.partial(_stats_kernel, n_valid=P, tp=tp),
        grid=(num_tiles,),
        in_specs=[x_spec] + weight_specs + [vec_spec, vec_spec],
        out_specs=(vec_spec, vec_spec),
        out_shape=(jax.ShapeDtypeStruct((ndf2, 1), jnp.float32),
                   jax.ShapeDtypeStruct((ndf2, 1), jnp.float32)),
        compiler_params=pltpu.CompilerParams(
            dimension_semantics=("arbitrary",),
            vmem_limit_bytes=32 * 1024 * 1024),
    )(x_cf, w1, b1, w2, gamma, beta)

    # Pass 2: recompute conv1/conv2, apply folded BN + LeakyReLU + conv3.
    out_flat = pl.pallas_call(
        _apply_kernel,
        grid=(num_tiles,),
        in_specs=[x_spec] + weight_specs + [vec_spec, vec_spec, vec_spec],
        out_specs=pl.BlockSpec((1, tp), lambda i: (0, i)),   # lane-dense out
        out_shape=jax.ShapeDtypeStruct((1, p_pad), jnp.float32),
        compiler_params=pltpu.CompilerParams(
            dimension_semantics=("parallel",),
            vmem_limit_bytes=32 * 1024 * 1024),
    )(x_cf, w1, b1, w2, scale, shift, w3)

    # (1, P_pad) -> (N, 1, H, W)
    return out_flat[0, :P].reshape(N, H, W)[:, None, :, :]


def init_params(key, input_nc, ndf):
    """Deterministic synthetic parameters. 1x1 conv weights stored as
    (Cout, Cin), matching the PyTorch Conv2d weight layout (squeezed)."""
    k1, k2, k3, k4, k5, k6 = jax.random.split(key, 6)
    w1 = 0.1 * jax.random.normal(k1, (ndf, input_nc), jnp.float32)
    b1 = 0.1 * jax.random.normal(k2, (ndf, 1), jnp.float32)
    w2 = 0.1 * jax.random.normal(k3, (2 * ndf, ndf), jnp.float32)
    gamma = 1.0 + 0.1 * jax.random.normal(k4, (2 * ndf, 1), jnp.float32)
    beta = 0.1 * jax.random.normal(k5, (2 * ndf, 1), jnp.float32)
    w3 = 0.1 * jax.random.normal(k6, (2 * ndf, 1), jnp.float32)
    return (w1, b1, w2, gamma, beta, w3)


def reference_forward(x_nchw, params):
    """Plain-JAX reference with identical semantics (training-mode BN)."""
    w1, b1, w2, gamma, beta, w3 = params
    N, Cin, H, W = x_nchw.shape
    x = jnp.transpose(x_nchw, (0, 2, 3, 1)).reshape(N * H * W, Cin)
    h1 = _leaky_relu(x @ w1.T + b1.reshape(1, -1))
    h2 = h1 @ w2.T
    mean = jnp.mean(h2, axis=0, keepdims=True)
    var = jnp.mean((h2 - mean) ** 2, axis=0, keepdims=True)
    h3 = _leaky_relu((h2 - mean) * jax.lax.rsqrt(var + BN_EPS)
                     * gamma.reshape(1, -1) + beta.reshape(1, -1))
    out = h3 @ w3                                   # (P, 1)
    return jnp.transpose(out.reshape(N, H, W, 1), (0, 3, 1, 2))


if __name__ == "__main__":
    key = jax.random.PRNGKey(0)
    kx, kp = jax.random.split(key)

    # Small shapes consistent with the module: N=2, input_nc=4, H=W=16, ndf=64.
    N, Cin, H, W = 2, 4, 16, 16
    ndf = 64

    x = jax.random.normal(kx, (N, Cin, H, W), jnp.float32)
    params = init_params(kp, Cin, ndf)

    # tile_pixels=256 -> 2 pixel tiles at this toy size, so the multi-tile
    # accumulation / pipelined path is exercised.
    out = pixel_discriminator(x, params, tile_pixels=256)
    out = jax.block_until_ready(out)

    ref = reference_forward(x, params)
    assert out.shape == (N, 1, H, W), out.shape
    err = float(jnp.max(jnp.abs(out - ref)))
    assert jnp.allclose(out, ref, atol=1e-4, rtol=1e-4), err

    print("KERNEL_OK")
</pallas_src>

<mosaic_0001>
module attributes {stable_mosaic.version = 11 : i64} {
  func.func @_stats_kernel(%arg0: i32, %arg1: memref<4x256xf32, #tpu.memory_space<vmem>>, %arg2: memref<64x4xf32, #tpu.memory_space<vmem>>, %arg3: memref<64x1xf32, #tpu.memory_space<vmem>>, %arg4: memref<128x64xf32, #tpu.memory_space<vmem>>, %arg5: memref<128x1xf32, #tpu.memory_space<vmem>>, %arg6: memref<128x1xf32, #tpu.memory_space<vmem>>, %arg7: memref<128x1xf32, #tpu.memory_space<vmem>>, %arg8: memref<128x1xf32, #tpu.memory_space<vmem>>) attributes {dimension_semantics = [#tpu.dimension_semantics<arbitrary>], iteration_bounds = array<i64: 2>, scalar_prefetch = 0 : i64, scratch_operands = 0 : i64, tpu.core_type = #tpu.core_type<tc>, window_params = [{transform_indices = @transform_0, window_bounds = array<i64: 4, 256>}, {pipeline_mode = #tpu.pipeline_mode<synchronous>, transform_indices = @transform_1, window_bounds = array<i64: 64, 4>}, {pipeline_mode = #tpu.pipeline_mode<synchronous>, transform_indices = @transform_2, window_bounds = array<i64: 64, 1>}, {pipeline_mode = #tpu.pipeline_mode<synchronous>, transform_indices = @transform_3, window_bounds = array<i64: 128, 64>}, {pipeline_mode = #tpu.pipeline_mode<synchronous>, transform_indices = @transform_4, window_bounds = array<i64: 128, 1>}, {pipeline_mode = #tpu.pipeline_mode<synchronous>, transform_indices = @transform_5, window_bounds = array<i64: 128, 1>}, {pipeline_mode = #tpu.pipeline_mode<synchronous>, transform_indices = @transform_6, window_bounds = array<i64: 128, 1>}, {pipeline_mode = #tpu.pipeline_mode<synchronous>, transform_indices = @transform_7, window_bounds = array<i64: 128, 1>}]} {
    %c0_i32 = arith.constant 0 : i32
    %0 = arith.cmpi eq, %arg0, %c0_i32 : i32
    %1 = arith.extui %0 : i1 to i32
    %c0_i32_0 = arith.constant 0 : i32
    %2 = arith.cmpi ne, %1, %c0_i32_0 : i32
    scf.if %2 {
      %cst_21 = arith.constant 0.000000e+00 : f32
      %62 = vector.broadcast %cst_21 : f32 to vector<128x1xf32>
      %c0_22 = arith.constant 0 : index
      %c0_23 = arith.constant 0 : index
      %63 = vector.load %arg7[%c0_22, %c0_23] : memref<128x1xf32, #tpu.memory_space<vmem>>, vector<128x1xf32>
      tpu.vector_store %arg7[%c0_22, %c0_23], %62 {strides = array<i32>} : memref<128x1xf32, #tpu.memory_space<vmem>>, vector<128x1xf32>,
      %cst_24 = arith.constant 0.000000e+00 : f32
      %64 = vector.broadcast %cst_24 : f32 to vector<128x1xf32>
      %c0_25 = arith.constant 0 : index
      %c0_26 = arith.constant 0 : index
      %65 = vector.load %arg8[%c0_25, %c0_26] : memref<128x1xf32, #tpu.memory_space<vmem>>, vector<128x1xf32>
      tpu.vector_store %arg8[%c0_25, %c0_26], %64 {strides = array<i32>} : memref<128x1xf32, #tpu.memory_space<vmem>>, vector<128x1xf32>,
    } else {
    }
    %c0 = arith.constant 0 : index
    %c0_1 = arith.constant 0 : index
    %3 = vector.load %arg1[%c0, %c0_1] : memref<4x256xf32, #tpu.memory_space<vmem>>, vector<4x256xf32>
    %c0_2 = arith.constant 0 : index
    %c0_3 = arith.constant 0 : index
    %4 = vector.load %arg2[%c0_2, %c0_3] : memref<64x4xf32, #tpu.memory_space<vmem>>, vector<64x4xf32>
    %c0_4 = arith.constant 0 : index
    %c0_5 = arith.constant 0 : index
    %5 = vector.load %arg3[%c0_4, %c0_5] : memref<64x1xf32, #tpu.memory_space<vmem>>, vector<64x1xf32>
    %6 = vector.extract_strided_slice %4 {offsets = [0, 0], sizes = [64, 1], strides = [1, 1]} : vector<64x4xf32> to vector<64x1xf32>
    %7 = vector.extract_strided_slice %3 {offsets = [0, 0], sizes = [1, 256], strides = [1, 1]} : vector<4x256xf32> to vector<1x256xf32>
    %8 = vector.broadcast %6 : vector<64x1xf32> to vector<64x256xf32>
    %9 = vector.broadcast %7 : vector<1x256xf32> to vector<64x256xf32>
    %10 = arith.mulf %8, %9 : vector<64x256xf32>
    %11 = vector.broadcast %5 : vector<64x1xf32> to vector<64x256xf32>
    %12 = arith.addf %11, %10 : vector<64x256xf32>
    %13 = vector.extract_strided_slice %4 {offsets = [0, 1], sizes = [64, 1], strides = [1, 1]} : vector<64x4xf32> to vector<64x1xf32>
    %14 = vector.extract_strided_slice %3 {offsets = [1, 0], sizes = [1, 256], strides = [1, 1]} : vector<4x256xf32> to vector<1x256xf32>
    %15 = vector.broadcast %13 : vector<64x1xf32> to vector<64x256xf32>
    %16 = vector.broadcast %14 : vector<1x256xf32> to vector<64x256xf32>
    %17 = arith.mulf %15, %16 : vector<64x256xf32>
    %18 = arith.addf %12, %17 : vector<64x256xf32>
    %19 = vector.extract_strided_slice %4 {offsets = [0, 2], sizes = [64, 1], strides = [1, 1]} : vector<64x4xf32> to vector<64x1xf32>
    %20 = vector.extract_strided_slice %3 {offsets = [2, 0], sizes = [1, 256], strides = [1, 1]} : vector<4x256xf32> to vector<1x256xf32>
    %21 = vector.broadcast %19 : vector<64x1xf32> to vector<64x256xf32>
    %22 = vector.broadcast %20 : vector<1x256xf32> to vector<64x256xf32>
    %23 = arith.mulf %21, %22 : vector<64x256xf32>
    %24 = arith.addf %18, %23 : vector<64x256xf32>
    %25 = vector.extract_strided_slice %4 {offsets = [0, 3], sizes = [64, 1], strides = [1, 1]} : vector<64x4xf32> to vector<64x1xf32>
    %26 = vector.extract_strided_slice %3 {offsets = [3, 0], sizes = [1, 256], strides = [1, 1]} : vector<4x256xf32> to vector<1x256xf32>
    %27 = vector.broadcast %25 : vector<64x1xf32> to vector<64x256xf32>
    %28 = vector.broadcast %26 : vector<1x256xf32> to vector<64x256xf32>
    %29 = arith.mulf %27, %28 : vector<64x256xf32>
    %30 = arith.addf %24, %29 : vector<64x256xf32>
    %cst = arith.constant 0.000000e+00 : f32
    %31 = vector.broadcast %cst : f32 to vector<64x256xf32>
    %32 = arith.cmpf ogt, %30, %31 : vector<64x256xf32>
    %cst_6 = arith.constant 2.000000e-01 : f32
    %33 = vector.broadcast %cst_6 : f32 to vector<64x256xf32>
    %34 = arith.mulf %33, %30 : vector<64x256xf32>
    %35 = arith.select %32, %30, %34 : vector<64x256xi1>, vector<64x256xf32>
    %c0_7 = arith.constant 0 : index
    %c0_8 = arith.constant 0 : index
    %36 = vector.load %arg4[%c0_7, %c0_8] : memref<128x64xf32, #tpu.memory_space<vmem>>, vector<128x64xf32>
    %cst_9 = arith.constant dense<0.000000e+00> : vector<128x256xf32>
    %37 = tpu.matmul %36, %35, %cst_9 {dimension_numbers = #tpu.dot_dimension_numbers<[1], [0], [0], [1], [0, 0, 1, 1], [], []>} : vector<128x64xf32>, vector<64x256xf32>, vector<128x256xf32> -> vector<128x256xf32>
    %38 = tpu.iota {dimensions = array<i32: 1>} : vector<1x256xi32>
    %c256_i32 = arith.constant 256 : i32
    %39 = arith.muli %arg0, %c256_i32 : i32
    %40 = vector.broadcast %39 : i32 to vector<1x256xi32>
    %41 = arith.addi %38, %40 : vector<1x256xi32>
    %c512_i32 = arith.constant 512 : i32
    %42 = vector.broadcast %c512_i32 : i32 to vector<1x256xi32>
    %43 = arith.cmpi slt, %41, %42 : vector<1x256xi32>
    %44 = arith.extui %43 : vector<1x256xi1> to vector<1x256xi32>
    %45 = arith.sitofp %44 : vector<1x256xi32> to vector<1x256xf32>
    %46 = vector.broadcast %45 : vector<1x256xf32> to vector<128x256xf32>
    %47 = arith.mulf %37, %46 : vector<128x256xf32>
    %c0_10 = arith.constant 0 : index
    %c0_11 = arith.constant 0 : index
    %48 = vector.load %arg7[%c0_10, %c0_11] : memref<128x1xf32, #tpu.memory_space<vmem>>, vector<128x1xf32>
    %cst_12 = arith.constant dense<0.000000e+00> : vector<128xf32>
    %49 = vector.multi_reduction <add>, %47, %cst_12 [1] : vector<128x256xf32> to vector<128xf32>
    %50 = vector.shape_cast %49 : vector<128xf32> to vector<128x1xf32>
    %51 = arith.addf %48, %50 : vector<128x1xf32>
    %c0_13 = arith.constant 0 : index
    %c0_14 = arith.constant 0 : index
    %52 = vector.load %arg7[%c0_13, %c0_14] : memref<128x1xf32, #tpu.memory_space<vmem>>, vector<128x1xf32>
    tpu.vector_store %arg7[%c0_13, %c0_14], %51 {strides = array<i32>} : memref<128x1xf32, #tpu.memory_space<vmem>>, vector<128x1xf32>,
    %c0_15 = arith.constant 0 : index
    %c0_16 = arith.constant 0 : index
    %53 = vector.load %arg8[%c0_15, %c0_16] : memref<128x1xf32, #tpu.memory_space<vmem>>, vector<128x1xf32>
    %54 = arith.mulf %47, %47 : vector<128x256xf32>
    %cst_17 = arith.constant dense<0.000000e+00> : vector<128xf32>
    %55 = vector.multi_reduction <add>, %54, %cst_17 [1] : vector<128x256xf32> to vector<128xf32>
    %56 = vector.shape_cast %55 : vector<128xf32> to vector<128x1xf32>
    %57 = arith.addf %53, %56 : vector<128x1xf32>
    %c0_18 = arith.constant 0 : index
    %c0_19 = arith.constant 0 : index
    %58 = vector.load %arg8[%c0_18, %c0_19] : memref<128x1xf32, #tpu.memory_space<vmem>>, vector<128x1xf32>
    tpu.vector_store %arg8[%c0_18, %c0_19], %57 {strides = array<i32>} : memref<128x1xf32, #tpu.memory_space<vmem>>, vector<128x1xf32>,
    %c1_i32 = arith.constant 1 : i32
    %59 = arith.cmpi eq, %arg0, %c1_i32 : i32
    %60 = arith.extui %59 : i1 to i32
    %c0_i32_20 = arith.constant 0 : i32
    %61 = arith.cmpi ne, %60, %c0_i32_20 : i32
    scf.if %61 {
      %c0_21 = arith.constant 0 : index
      %c0_22 = arith.constant 0 : index
      %62 = vector.load %arg7[%c0_21, %c0_22] : memref<128x1xf32, #tpu.memory_space<vmem>>, vector<128x1xf32>
      %cst_23 = arith.constant 0.001953125 : f32
      %63 = vector.broadcast %cst_23 : f32 to vector<128x1xf32>
      %64 = arith.mulf %62, %63 : vector<128x1xf32>
      %c0_24 = arith.constant 0 : index
      %c0_25 = arith.constant 0 : index
      %65 = vector.load %arg8[%c0_24, %c0_25] : memref<128x1xf32, #tpu.memory_space<vmem>>, vector<128x1xf32>
      %cst_26 = arith.constant 0.001953125 : f32
      %66 = vector.broadcast %cst_26 : f32 to vector<128x1xf32>
      %67 = arith.mulf %65, %66 : vector<128x1xf32>
      %68 = arith.mulf %64, %64 : vector<128x1xf32>
      %69 = arith.subf %67, %68 : vector<128x1xf32>
      %c0_27 = arith.constant 0 : index
      %c0_28 = arith.constant 0 : index
      %70 = vector.load %arg5[%c0_27, %c0_28] : memref<128x1xf32, #tpu.memory_space<vmem>>, vector<128x1xf32>
      %cst_29 = arith.constant 9.99999974E-6 : f32
      %71 = vector.broadcast %cst_29 : f32 to vector<128x1xf32>
      %72 = arith.addf %69, %71 : vector<128x1xf32>
      %73 = math.rsqrt %72 : vector<128x1xf32>
      %74 = arith.mulf %70, %73 : vector<128x1xf32>
      %c0_30 = arith.constant 0 : index
      %c0_31 = arith.constant 0 : index
      %75 = vector.load %arg7[%c0_30, %c0_31] : memref<128x1xf32, #tpu.memory_space<vmem>>, vector<128x1xf32>
      tpu.vector_store %arg7[%c0_30, %c0_31], %74 {strides = array<i32>} : memref<128x1xf32, #tpu.memory_space<vmem>>, vector<128x1xf32>,
      %c0_32 = arith.constant 0 : index
      %c0_33 = arith.constant 0 : index
      %76 = vector.load %arg6[%c0_32, %c0_33] : memref<128x1xf32, #tpu.memory_space<vmem>>, vector<128x1xf32>
      %77 = arith.mulf %64, %74 : vector<128x1xf32>
      %78 = arith.subf %76, %77 : vector<128x1xf32>
      %c0_34 = arith.constant 0 : index
      %c0_35 = arith.constant 0 : index
      %79 = vector.load %arg8[%c0_34, %c0_35] : memref<128x1xf32, #tpu.memory_space<vmem>>, vector<128x1xf32>
      tpu.vector_store %arg8[%c0_34, %c0_35], %78 {strides = array<i32>} : memref<128x1xf32, #tpu.memory_space<vmem>>, vector<128x1xf32>,
    } else {
    }
    return
  }
  func.func @transform_0(%arg0: i32) -> (i32, i32) {
    %c0_i32 = arith.constant 0 : i32
    %c0_i32_0 = arith.constant 0 : i32
    return %c0_i32, %arg0 : i32, i32
  }
  func.func @transform_1(%arg0: i32) -> (i32, i32) {
    %c0_i32 = arith.constant 0 : i32
    %c0_i32_0 = arith.constant 0 : i32
    %c0_i32_1 = arith.constant 0 : i32
    return %c0_i32, %c0_i32_0 : i32, i32
  }
  func.func @transform_2(%arg0: i32) -> (i32, i32) {
    %c0_i32 = arith.constant 0 : i32
    %c0_i32_0 = arith.constant 0 : i32
    %c0_i32_1 = arith.constant 0 : i32
    return %c0_i32, %c0_i32_0 : i32, i32
  }
  func.func @transform_3(%arg0: i32) -> (i32, i32) {
    %c0_i32 = arith.constant 0 : i32
    %c0_i32_0 = arith.constant 0 : i32
    %c0_i32_1 = arith.constant 0 : i32
    return %c0_i32, %c0_i32_0 : i32, i32
  }
  func.func @transform_4(%arg0: i32) -> (i32, i32) {
    %c0_i32 = arith.constant 0 : i32
    %c0_i32_0 = arith.constant 0 : i32
    %c0_i32_1 = arith.constant 0 : i32
    return %c0_i32, %c0_i32_0 : i32, i32
  }
  func.func @transform_5(%arg0: i32) -> (i32, i32) {
    %c0_i32 = arith.constant 0 : i32
    %c0_i32_0 = arith.constant 0 : i32
    %c0_i32_1 = arith.constant 0 : i32
    return %c0_i32, %c0_i32_0 : i32, i32
  }
  func.func @transform_6(%arg0: i32) -> (i32, i32) {
    %c0_i32 = arith.constant 0 : i32
    %c0_i32_0 = arith.constant 0 : i32
    %c0_i32_1 = arith.constant 0 : i32
    return %c0_i32, %c0_i32_0 : i32, i32
  }
  func.func @transform_7(%arg0: i32) -> (i32, i32) {
    %c0_i32 = arith.constant 0 : i32
    %c0_i32_0 = arith.constant 0 : i32
    %c0_i32_1 = arith.constant 0 : i32
    return %c0_i32, %c0_i32_0 : i32, i32
  }
}

</mosaic_0001>

<llo_original>
// kernel: tpu_custom_call.1
$region0: #{tpu_custom_call.1}
  #allocation0 [shape = 'u32[]', space=smem, size = 0x4, offset = 0x4, fixed_abs, tag = 'smem constant byte address 0x4 - core index']
  #allocation1 [shape = 'u32[72,128]{1,0:T(1,128)}', space=vmem, size = 0x9000, scoped, tag = 'internal scratch']
  %s0 = inlined_call_operand.vmem [shape: f32[4,512], index: 0, kind: input, shape index: {}]
  %s1 = inlined_call_operand.vmem [shape: f32[64,4], index: 1, kind: input, shape index: {}]
  %s2 = inlined_call_operand.vmem [shape: f32[64,1], index: 2, kind: input, shape index: {}]
  %s3 = inlined_call_operand.vmem [shape: f32[128,64], index: 3, kind: input, shape index: {}]
  %s4 = inlined_call_operand.vmem [shape: f32[128,1], index: 4, kind: input, shape index: {}]
  %s5 = inlined_call_operand.vmem [shape: f32[128,1], index: 5, kind: input, shape index: {}]
  %s6 = inlined_call_operand.vmem [shape: f32[128,1], index: 6, kind: output, shape index: {0}]
  %s7 = inlined_call_operand.vmem [shape: f32[128,1], index: 7, kind: output, shape index: {1}]
  %8 = xla_tuple %s6, %s7
  %s9 = sld [smem:[#allocation0]]
  $region73: #{tpu_custom_call.1} parent=0
    _
  %s11 = ssub.s32 1, %s9
  %s12 = scalar_select 0, %s11, %s9
  loop: start=0, step=1, limit=4
  $region2: #{tpu_custom_call.1} parent=0 // loop_pre_header
    _
  $region3: #{tpu_custom_call.1} parent=0 // loop_header
    %s14 = sphi 0, %s18
    %p15 = scmp.ge.s32.totalorder %s14, 4
    %s24 = sphi 0, %s26
    %s27 = sphi 0, %s24
    %s28 = sphi 0, %s27
    %s44 = sphi 0, %s28
    %s48 = sphi 0, %s48
    %s50 = sphi 0, %s48
    %s51 = sphi 0, %s50
    %s65 = sphi 0, %s51
    %s69 = sphi 0, %s69
    %s71 = sphi 0, %s69
    %s72 = sphi 0, %s71
    %s86 = sphi 0, %s72
    %s90 = sphi 0, %s90
    %s92 = sphi 0, %s90
    %s93 = sphi 0, %s92
    %s107 = sphi 0, %s93
    %s111 = sphi 0, %s111
    %s113 = sphi 0, %s111
    %s114 = sphi 0, %s113
    %s128 = sphi 0, %s114
    %s132 = sphi 0, %s132
    %s134 = sphi 0, %s132
    %s135 = sphi 0, %s134
    %s149 = sphi 0, %s135
    %s153 = sphi 0, %s153
    %s155 = sphi 0, %s153
    %s156 = sphi 0, %s155
    %s170 = sphi 0, %s156
    %s174 = sphi 0, %s174
    %s176 = sphi 0, %s174
    %s177 = sphi 0, %s176
    %s191 = sphi 0, %s177
  $region4: #{tpu_custom_call.1} parent=0 // loop_header_branch
    %17 = sbr.rel (%p15) target = $region8
  $region5: #{tpu_custom_call.1} parent=0 // loop_body
    %s19 = ssub.s32 %s14, 1
    %s20 = ssub.s32 %s14, 2
    %s21 = sadd.s32 %s14, 1
    %s22 = ssub.s32 %s14, %s21
    %p23 = scmp.eq.s32.totalorder %s22, 0
    %s25 = sadd.s32 %s24, 1
    %s26 = scalar_select %p23, %s24, %s25
    %p29 = pneg %p23
    %p30 = scmp.eq.s32.totalorder %s14, 1
    %p31 = por %p29, %p30
    %p32 = scmp.ne.s32.totalorder %s24, %s27
    %p33 = scmp.eq.s32.totalorder %s14, 0
    %p34 = por %p32, %p33
    %p35 = scmp.ne.s32.totalorder %s24, %s27
    %p36 = scmp.eq.s32.totalorder %s19, 1
    %p37 = por %p35, %p36
    %p38 = scmp.ne.s32.totalorder %s27, %s28
    %p39 = scmp.eq.s32.totalorder %s19, 0
    %p40 = por %p38, %p39
    %p41 = scmp.ne.s32.totalorder %s27, %s28
    %p42 = scmp.eq.s32.totalorder %s20, 1
    %p43 = por %p41, %p42
    %p45 = scmp.ne.s32.totalorder %s28, %s44
    %p46 = scmp.eq.s32.totalorder %s20, 0
    %p47 = por %p45, %p46
    %s49 = sadd.s32 %s48, 1
    %p52 = scmp.eq.s32.totalorder %s14, 1
    %p53 = scmp.ne.s32.totalorder %s48, %s50
    %p54 = scmp.eq.s32.totalorder %s14, 0
    %p55 = por %p53, %p54
    %p56 = scmp.ne.s32.totalorder %s48, %s50
    %p57 = scmp.eq.s32.totalorder %s19, 1
    %p58 = por %p56, %p57
    %p59 = scmp.ne.s32.totalorder %s50, %s51
    %p60 = scmp.eq.s32.totalorder %s19, 0
    %p61 = por %p59, %p60
    %p62 = scmp.ne.s32.totalorder %s50, %s51
    %p63 = scmp.eq.s32.totalorder %s20, 1
    %p64 = por %p62, %p63
    %p66 = scmp.ne.s32.totalorder %s51, %s65
    %p67 = scmp.eq.s32.totalorder %s20, 0
    %p68 = por %p66, %p67
    %s70 = sadd.s32 %s69, 1
    %p73 = scmp.eq.s32.totalorder %s14, 1
    %p74 = scmp.ne.s32.totalorder %s69, %s71
    %p75 = scmp.eq.s32.totalorder %s14, 0
    %p76 = por %p74, %p75
    %p77 = scmp.ne.s32.totalorder %s69, %s71
    %p78 = scmp.eq.s32.totalorder %s19, 1
    %p79 = por %p77, %p78
    %p80 = scmp.ne.s32.totalorder %s71, %s72
    %p81 = scmp.eq.s32.totalorder %s19, 0
    %p82 = por %p80, %p81
    %p83 = scmp.ne.s32.totalorder %s71, %s72
    %p84 = scmp.eq.s32.totalorder %s20, 1
    %p85 = por %p83, %p84
    %p87 = scmp.ne.s32.totalorder %s72, %s86
    %p88 = scmp.eq.s32.totalorder %s20, 0
    %p89 = por %p87, %p88
    %s91 = sadd.s32 %s90, 1
    %p94 = scmp.eq.s32.totalorder %s14, 1
    %p95 = scmp.ne.s32.totalorder %s90, %s92
    %p96 = scmp.eq.s32.totalorder %s14, 0
    %p97 = por %p95, %p96
    %p98 = scmp.ne.s32.totalorder %s90, %s92
    %p99 = scmp.eq.s32.totalorder %s19, 1
    %p100 = por %p98, %p99
    %p101 = scmp.ne.s32.totalorder %s92, %s93
    %p102 = scmp.eq.s32.totalorder %s19, 0
    %p103 = por %p101, %p102
    %p104 = scmp.ne.s32.totalorder %s92, %s93
    %p105 = scmp.eq.s32.totalorder %s20, 1
    %p106 = por %p104, %p105
    %p108 = scmp.ne.s32.totalorder %s93, %s107
    %p109 = scmp.eq.s32.totalorder %s20, 0
    %p110 = por %p108, %p109
    %s112 = sadd.s32 %s111, 1
    %p115 = scmp.eq.s32.totalorder %s14, 1
    %p116 = scmp.ne.s32.totalorder %s111, %s113
    %p117 = scmp.eq.s32.totalorder %s14, 0
    %p118 = por %p116, %p117
    %p119 = scmp.ne.s32.totalorder %s111, %s113
    %p120 = scmp.eq.s32.totalorder %s19, 1
    %p121 = por %p119, %p120
    %p122 = scmp.ne.s32.totalorder %s113, %s114
    %p123 = scmp.eq.s32.totalorder %s19, 0
    %p124 = por %p122, %p123
    %p125 = scmp.ne.s32.totalorder %s113, %s114
    %p126 = scmp.eq.s32.totalorder %s20, 1
    %p127 = por %p125, %p126
    %p129 = scmp.ne.s32.totalorder %s114, %s128
    %p130 = scmp.eq.s32.totalorder %s20, 0
    %p131 = por %p129, %p130
    %s133 = sadd.s32 %s132, 1
    %p136 = scmp.eq.s32.totalorder %s14, 1
    %p137 = scmp.ne.s32.totalorder %s132, %s134
    %p138 = scmp.eq.s32.totalorder %s14, 0
    %p139 = por %p137, %p138
    %p140 = scmp.ne.s32.totalorder %s132, %s134
    %p141 = scmp.eq.s32.totalorder %s19, 1
    %p142 = por %p140, %p141
    %p143 = scmp.ne.s32.totalorder %s134, %s135
    %p144 = scmp.eq.s32.totalorder %s19, 0
    %p145 = por %p143, %p144
    %p146 = scmp.ne.s32.totalorder %s134, %s135
    %p147 = scmp.eq.s32.totalorder %s20, 1
    %p148 = por %p146, %p147
    %p150 = scmp.ne.s32.totalorder %s135, %s149
    %p151 = scmp.eq.s32.totalorder %s20, 0
    %p152 = por %p150, %p151
    %s154 = sadd.s32 %s153, 1
    %p157 = scmp.eq.s32.totalorder %s14, 1
    %p158 = scmp.ne.s32.totalorder %s153, %s155
    %p159 = scmp.eq.s32.totalorder %s14, 0
    %p160 = por %p158, %p159
    %p161 = scmp.ne.s32.totalorder %s153, %s155
    %p162 = scmp.eq.s32.totalorder %s19, 1
    %p163 = por %p161, %p162
    %p164 = scmp.ne.s32.totalorder %s155, %s156
    %p165 = scmp.eq.s32.totalorder %s19, 0
    %p166 = por %p164, %p165
    %p167 = scmp.ne.s32.totalorder %s155, %s156
    %p168 = scmp.eq.s32.totalorder %s20, 1
    %p169 = por %p167, %p168
    %p171 = scmp.ne.s32.totalorder %s156, %s170
    %p172 = scmp.eq.s32.totalorder %s20, 0
    %p173 = por %p171, %p172
    %s175 = sadd.s32 %s174, 1
    %p178 = scmp.eq.s32.totalorder %s14, 1
    %p179 = scmp.ne.s32.totalorder %s174, %s176
    %p180 = scmp.eq.s32.totalorder %s14, 0
    %p181 = por %p179, %p180
    %p182 = scmp.ne.s32.totalorder %s174, %s176
    %p183 = scmp.eq.s32.totalorder %s19, 1
    %p184 = por %p182, %p183
    %p185 = scmp.ne.s32.totalorder %s176, %s177
    %p186 = scmp.eq.s32.totalorder %s19, 0
    %p187 = por %p185, %p186
    %p188 = scmp.ne.s32.totalorder %s176, %s177
    %p189 = scmp.eq.s32.totalorder %s20, 1
    %p190 = por %p188, %p189
    %p192 = scmp.ne.s32.totalorder %s177, %s191
    %p193 = scmp.eq.s32.totalorder %s20, 0
    %p194 = por %p192, %p193
    %p195 = scmp.le.s32.totalorder 1, %s14
    %p196 = scmp.lt.s32.totalorder %s14, 3
    %p197 = pnand %p195, %p196
    %p198 = pneg %p197
    // Predicated region
    $region9: #{tpu_custom_call.1} parent=5 // pred_check
      _
    $region10: #{tpu_custom_call.1} parent=5 // pred_check_branch
      %200 = sbr.rel (%p197) target = $region12
    $region11: #{tpu_custom_call.1} parent=5 // pred_region
      %s201 = ssub.s32 %s14, 1
      // Predicated region
      $region13: #{tpu_custom_call.1} parent=11 // pred_check
        %p202 = pneg %p61
      $region14: #{tpu_custom_call.1} parent=11 // pred_check_branch
        %204 = sbr.rel (%p202) target = $region16
      $region15: #{tpu_custom_call.1} parent=11 // pred_region
        _
      $region16: #{tpu_custom_call.1} parent=11 // pred_fallthru
        _
      // Predicated region
      $region17: #{tpu_custom_call.1} parent=11 // pred_check
        %p205 = pneg %p82
      $region18: #{tpu_custom_call.1} parent=11 // pred_check_branch
        %207 = sbr.rel (%p205) target = $region20
      $region19: #{tpu_custom_call.1} parent=11 // pred_region
        _
      $region20: #{tpu_custom_call.1} parent=11 // pred_fallthru
        _
      // Predicated region
      $region21: #{tpu_custom_call.1} parent=11 // pred_check
        %p208 = pneg %p103
      $region22: #{tpu_custom_call.1} parent=11 // pred_check_branch
        %210 = sbr.rel (%p208) target = $region24
      $region23: #{tpu_custom_call.1} parent=11 // pred_region
        _
      $region24: #{tpu_custom_call.1} parent=11 // pred_fallthru
        _
      // Predicated region
      $region25: #{tpu_custom_call.1} parent=11 // pred_check
        %p211 = pneg %p124
      $region26: #{tpu_custom_call.1} parent=11 // pred_check_branch
        %213 = sbr.rel (%p211) target = $region28
      $region27: #{tpu_custom_call.1} parent=11 // pred_region
        _
      $region28: #{tpu_custom_call.1} parent=11 // pred_fallthru
        _
      // Predicated region
      $region29: #{tpu_custom_call.1} parent=11 // pred_check
        %p214 = pneg %p145
      $region30: #{tpu_custom_call.1} parent=11 // pred_check_branch
        %216 = sbr.rel (%p214) target = $region32
      $region31: #{tpu_custom_call.1} parent=11 // pred_region
        _
      $region32: #{tpu_custom_call.1} parent=11 // pred_fallthru
        _
    $region12: #{tpu_custom_call.1} parent=5 // pred_fallthru
      _
    %p217 = scmp.lt.s32.totalorder %s14, 2
    // Predicated region
    $region33: #{tpu_custom_call.1} parent=5 // pred_check
      %p218 = pneg %p217
    $region34: #{tpu_custom_call.1} parent=5 // pred_check_branch
      %220 = sbr.rel (%p218) target = $region36
    $region35: #{tpu_custom_call.1} parent=5 // pred_region
      // Predicated region
      $region37: #{tpu_custom_call.1} parent=35 // pred_check
        %p221 = pneg %p34
      $region38: #{tpu_custom_call.1} parent=35 // pred_check_branch
        %223 = sbr.rel (%p221) target = $region40
      $region39: #{tpu_custom_call.1} parent=35 // pred_region
        %s224 = smul.u32 2, %s14
        %p225 = scmp.lt.s32.totalorder %s224, 3
        %s226 = scalar_select %p225, %s224, 3
        %s227 = smul.addr %s226, 4
        %s228 = scalar_lea.vmem %s0, %s227
        %s229 = smul.u32 2, %s14
      $region40: #{tpu_custom_call.1} parent=35 // pred_fallthru
        _
    $region36: #{tpu_custom_call.1} parent=5 // pred_fallthru
      _
    %p230 = scmp.le.s32.totalorder 1, %s14
    %p231 = scmp.lt.s32.totalorder %s14, 3
    %p232 = pnand %p230, %p231
    %p233 = pneg %p232
    // Predicated region
    $region41: #{tpu_custom_call.1} parent=5 // pred_check
      _
    $region42: #{tpu_custom_call.1} parent=5 // pred_check_branch
      %235 = sbr.rel (%p232) target = $region44
    $region43: #{tpu_custom_call.1} parent=5 // pred_region
      %s236 = ssub.s32 %s14, 1
      %s237 = smul.u32 2, %s19
      %p238 = scmp.lt.s32.totalorder %s237, 3
      %s239 = scalar_select %p238, %s237, 3
      %s240 = smul.addr %s239, 4
      %s241 = scalar_lea.vmem %s0, %s240
      %p242 = pneg %p40
      %p243 = pneg %p37
      %p244 = pneg %p61
      %p245 = pneg %p58
      %p246 = pneg %p82
      %p247 = pneg %p79
      %p248 = pneg %p103
      %p249 = pneg %p100
      %p250 = pneg %p124
      %p251 = pneg %p121
      %p252 = pneg %p145
      %p253 = pneg %p142
      %p254 = pneg %p166
      %p255 = pneg %p163
      %p256 = pneg %p187
      %p257 = pneg %p184
      %s258 = smul.u32 2, %s19
      %p259 = scmp.lt.s32.totalorder %s258, 3
      %s260 = scalar_select %p259, %s258, 3
      %s261 = smul.addr %s260, 4
      %s262 = scalar_lea.vmem %s0, %s261
      %s263 = smul.u32 2, %s19
      %p264 = scmp.eq.s32.totalorder %s19, 0
      // Predicated region
      $region45: #{tpu_custom_call.1} parent=43 // pred_check
        %p265 = pneg %p264
      $region46: #{tpu_custom_call.1} parent=43 // pred_check_branch
        %267 = sbr.rel (%p265) target = $region48
      $region47: #{tpu_custom_call.1} parent=43 // pred_region
        %vm268 = vcmask 7168
        %269 = vst.msk [vmem:[%s6] sm:$0xff] %vm268, 0.0
        %270 = vst.msk [vmem:[%s6 + $0x8] sm:$0xff] %vm268, 0.0
        %271 = vst.msk [vmem:[%s6 + $0x10] sm:$0xff] %vm268, 0.0
        %272 = vst.msk [vmem:[%s6 + $0x18] sm:$0xff] %vm268, 0.0
        %273 = vst.msk [vmem:[%s6 + $0x20] sm:$0xff] %vm268, 0.0
        %274 = vst.msk [vmem:[%s6 + $0x28] sm:$0xff] %vm268, 0.0
        %275 = vst.msk [vmem:[%s6 + $0x30] sm:$0xff] %vm268, 0.0
        %276 = vst.msk [vmem:[%s6 + $0x38] sm:$0xff] %vm268, 0.0
        %277 = vst.msk [vmem:[%s6 + $0x40] sm:$0xff] %vm268, 0.0
        %278 = vst.msk [vmem:[%s6 + $0x48] sm:$0xff] %vm268, 0.0
        %279 = vst.msk [vmem:[%s6 + $0x50] sm:$0xff] %vm268, 0.0
        %280 = vst.msk [vmem:[%s6 + $0x58] sm:$0xff] %vm268, 0.0
        %281 = vst.msk [vmem:[%s6 + $0x60] sm:$0xff] %vm268, 0.0
        %282 = vst.msk [vmem:[%s6 + $0x68] sm:$0xff] %vm268, 0.0
        %283 = vst.msk [vmem:[%s6 + $0x70] sm:$0xff] %vm268, 0.0
        %284 = vst.msk [vmem:[%s6 + $0x78] sm:$0xff] %vm268, 0.0
        %285 = vst.msk [vmem:[%s7] sm:$0xff] %vm268, 0.0
        %286 = vst.msk [vmem:[%s7 + $0x8] sm:$0xff] %vm268, 0.0
        %287 = vst.msk [vmem:[%s7 + $0x10] sm:$0xff] %vm268, 0.0
        %288 = vst.msk [vmem:[%s7 + $0x18] sm:$0xff] %vm268, 0.0
        %289 = vst.msk [vmem:[%s7 + $0x20] sm:$0xff] %vm268, 0.0
        %290 = vst.msk [vmem:[%s7 + $0x28] sm:$0xff] %vm268, 0.0
        %291 = vst.msk [vmem:[%s7 + $0x30] sm:$0xff] %vm268, 0.0
        %292 = vst.msk [vmem:[%s7 + $0x38] sm:$0xff] %vm268, 0.0
        %293 = vst.msk [vmem:[%s7 + $0x40] sm:$0xff] %vm268, 0.0
        %294 = vst.msk [vmem:[%s7 + $0x48] sm:$0xff] %vm268, 0.0
        %295 = vst.msk [vmem:[%s7 + $0x50] sm:$0xff] %vm268, 0.0
        %296 = vst.msk [vmem:[%s7 + $0x58] sm:$0xff] %vm268, 0.0
        %297 = vst.msk [vmem:[%s7 + $0x60] sm:$0xff] %vm268, 0.0
        %298 = vst.msk [vmem:[%s7 + $0x68] sm:$0xff] %vm268, 0.0
        %299 = vst.msk [vmem:[%s7 + $0x70] sm:$0xff] %vm268, 0.0
        %300 = vst.msk [vmem:[%s7 + $0x78] sm:$0xff] %vm268, 0.0
      $region48: #{tpu_custom_call.1} parent=43 // pred_fallthru
        _
      %v301 = vld [vmem:[%s262] sm:$0xff]
      %v302 = vld [vmem:[%s1] sm:$0xff]
      %v303 = vld [vmem:[%s1 + $0x8] sm:$0xff]
      %v304 = vld [vmem:[%s1 + $0x10] sm:$0xff]
      %v305 = vld [vmem:[%s1 + $0x18] sm:$0xff]
      %v306 = vld [vmem:[%s1 + $0x20] sm:$0xff]
      %v307 = vld [vmem:[%s1 + $0x28] sm:$0xff]
      %v308 = vld [vmem:[%s1 + $0x30] sm:$0xff]
      %v309 = vld [vmem:[%s1 + $0x38] sm:$0xff]
      %v310 = vld [vmem:[%s2] sm:$0xff]
      %v311 = vld [vmem:[%s2 + $0x8] sm:$0xff]
      %v312 = vld [vmem:[%s2 + $0x10] sm:$0xff]
      %v313 = vld [vmem:[%s2 + $0x18] sm:$0xff]
      %v314 = vld [vmem:[%s2 + $0x20] sm:$0xff]
      %v315 = vld [vmem:[%s2 + $0x28] sm:$0xff]
      %v316 = vld [vmem:[%s2 + $0x30] sm:$0xff]
      %v317 = vld [vmem:[%s2 + $0x38] sm:$0xff]
      %319 = vset.pattern.permute.xlu0 0
      %320 = vperm.xlu0 %319, %v302
      %v321 = vpop.permute.xlu0 %320
      %324 = vset.pattern.permute.xlu0 0
      %325 = vperm.xlu0 %324, %v303
      %v326 = vpop.permute.xlu0 %325
      %329 = vset.pattern.permute.xlu0 0
      %330 = vperm.xlu0 %329, %v304
      %v331 = vpop.permute.xlu0 %330
      %334 = vset.pattern.permute.xlu0 0
      %335 = vperm.xlu0 %334, %v305
      %v336 = vpop.permute.xlu0 %335
      %339 = vset.pattern.permute.xlu0 0
      %340 = vperm.xlu0 %339, %v306
      %v341 = vpop.permute.xlu0 %340
      %344 = vset.pattern.permute.xlu0 0
      %345 = vperm.xlu0 %344, %v307
      %v346 = vpop.permute.xlu0 %345
      %349 = vset.pattern.permute.xlu0 0
      %350 = vperm.xlu0 %349, %v308
      %v351 = vpop.permute.xlu0 %350
      %354 = vset.pattern.permute.xlu0 0
      %355 = vperm.xlu0 %354, %v309
      %v356 = vpop.permute.xlu0 %355
      %v359 = vperm.slane %v301, 0
      %v360 = vperm.slane %v301, 4
      %v363 = vperm.slane %v359, 0
      %v364 = vperm.slane %v360, 0
      %v365 = vmul.f32 %v321, %v363
      %v366 = vmul.f32 %v321, %v364
      %v367 = vmul.f32 %v326, %v363
      %v368 = vmul.f32 %v326, %v364
      %v369 = vmul.f32 %v331, %v363
      %v370 = vmul.f32 %v331, %v364
      %v371 = vmul.f32 %v336, %v363
      %v372 = vmul.f32 %v336, %v364
      %v373 = vmul.f32 %v341, %v363
      %v374 = vmul.f32 %v341, %v364
      %v375 = vmul.f32 %v346, %v363
      %v376 = vmul.f32 %v346, %v364
      %v377 = vmul.f32 %v351, %v363
      %v378 = vmul.f32 %v351, %v364
      %v379 = vmul.f32 %v356, %v363
      %v380 = vmul.f32 %v356, %v364
      %382 = vset.pattern.permute.xlu0 0
      %383 = vperm.xlu0 %382, %v310
      %v384 = vpop.permute.xlu0 %383
      %387 = vset.pattern.permute.xlu0 0
      %388 = vperm.xlu0 %387, %v311
      %v389 = vpop.permute.xlu0 %388
      %392 = vset.pattern.permute.xlu0 0
      %393 = vperm.xlu0 %392, %v312
      %v394 = vpop.permute.xlu0 %393
      %397 = vset.pattern.permute.xlu0 0
      %398 = vperm.xlu0 %397, %v313
      %v399 = vpop.permute.xlu0 %398
      %402 = vset.pattern.permute.xlu0 0
      %403 = vperm.xlu0 %402, %v314
      %v404 = vpop.permute.xlu0 %403
      %407 = vset.pattern.permute.xlu0 0
      %408 = vperm.xlu0 %407, %v315
      %v409 = vpop.permute.xlu0 %408
      %412 = vset.pattern.permute.xlu0 0
      %413 = vperm.xlu0 %412, %v316
      %v414 = vpop.permute.xlu0 %413
      %417 = vset.pattern.permute.xlu0 0
      %418 = vperm.xlu0 %417, %v317
      %v419 = vpop.permute.xlu0 %418
      %v421 = vadd.f32 %v384, %v365
      %v422 = vadd.f32 %v384, %v366
      %v423 = vadd.f32 %v389, %v367
      %v424 = vadd.f32 %v389, %v368
      %v425 = vadd.f32 %v394, %v369
      %v426 = vadd.f32 %v394, %v370
      %v427 = vadd.f32 %v399, %v371
      %v428 = vadd.f32 %v399, %v372
      %v429 = vadd.f32 %v404, %v373
      %v430 = vadd.f32 %v404, %v374
      %v431 = vadd.f32 %v409, %v375
      %v432 = vadd.f32 %v409, %v376
      %v433 = vadd.f32 %v414, %v377
      %v434 = vadd.f32 %v414, %v378
      %v435 = vadd.f32 %v419, %v379
      %v436 = vadd.f32 %v419, %v380
      %437 = vset.pattern.permute.xlu0 1
      %438 = vperm.xlu0 %437, %v302
      %v439 = vpop.permute.xlu0 %438
      %441 = vset.pattern.permute.xlu0 1
      %442 = vperm.xlu0 %441, %v303
      %v443 = vpop.permute.xlu0 %442
      %445 = vset.pattern.permute.xlu0 1
      %446 = vperm.xlu0 %445, %v304
      %v447 = vpop.permute.xlu0 %446
      %449 = vset.pattern.permute.xlu0 1
      %450 = vperm.xlu0 %449, %v305
      %v451 = vpop.permute.xlu0 %450
      %453 = vset.pattern.permute.xlu0 1
      %454 = vperm.xlu0 %453, %v306
      %v455 = vpop.permute.xlu0 %454
      %457 = vset.pattern.permute.xlu0 1
      %458 = vperm.xlu0 %457, %v307
      %v459 = vpop.permute.xlu0 %458
      %461 = vset.pattern.permute.xlu0 1
      %462 = vperm.xlu0 %461, %v308
      %v463 = vpop.permute.xlu0 %462
      %465 = vset.pattern.permute.xlu0 1
      %466 = vperm.xlu0 %465, %v309
      %v467 = vpop.permute.xlu0 %466
      %v469 = vperm.slane %v301, 1
      %v470 = vperm.slane %v301, 5
      %v473 = vperm.slane %v469, 1
      %v474 = vperm.slane %v470, 1
      %v475 = vmul.f32 %v439, %v473
      %v476 = vmul.f32 %v439, %v474
      %v477 = vmul.f32 %v443, %v473
      %v478 = vmul.f32 %v443, %v474
      %v479 = vmul.f32 %v447, %v473
      %v480 = vmul.f32 %v447, %v474
      %v481 = vmul.f32 %v451, %v473
      %v482 = vmul.f32 %v451, %v474
      %v483 = vmul.f32 %v455, %v473
      %v484 = vmul.f32 %v455, %v474
      %v485 = vmul.f32 %v459, %v473
      %v486 = vmul.f32 %v459, %v474
      %v487 = vmul.f32 %v463, %v473
      %v488 = vmul.f32 %v463, %v474
      %v489 = vmul.f32 %v467, %v473
      %v490 = vmul.f32 %v467, %v474
      %v491 = vadd.f32 %v421, %v475
      %v492 = vadd.f32 %v422, %v476
      %v493 = vadd.f32 %v423, %v477
      %v494 = vadd.f32 %v424, %v478
      %v495 = vadd.f32 %v425, %v479
      %v496 = vadd.f32 %v426, %v480
      %v497 = vadd.f32 %v427, %v481
      %v498 = vadd.f32 %v428, %v482
      %v499 = vadd.f32 %v429, %v483
      %v500 = vadd.f32 %v430, %v484
      %v501 = vadd.f32 %v431, %v485
      %v502 = vadd.f32 %v432, %v486
      %v503 = vadd.f32 %v433, %v487
      %v504 = vadd.f32 %v434, %v488
      %v505 = vadd.f32 %v435, %v489
      %v506 = vadd.f32 %v436, %v490
      %507 = vset.pattern.permute.xlu0 2
      %508 = vperm.xlu0 %507, %v302
      %v509 = vpop.permute.xlu0 %508
      %511 = vset.pattern.permute.xlu0 2
      %512 = vperm.xlu0 %511, %v303
      %v513 = vpop.permute.xlu0 %512
      %515 = vset.pattern.permute.xlu0 2
      %516 = vperm.xlu0 %515, %v304
      %v517 = vpop.permute.xlu0 %516
      %519 = vset.pattern.permute.xlu0 2
      %520 = vperm.xlu0 %519, %v305
      %v521 = vpop.permute.xlu0 %520
      %523 = vset.pattern.permute.xlu0 2
      %524 = vperm.xlu0 %523, %v306
      %v525 = vpop.permute.xlu0 %524
      %527 = vset.pattern.permute.xlu0 2
      %528 = vperm.xlu0 %527, %v307
      %v529 = vpop.permute.xlu0 %528
      %531 = vset.pattern.permute.xlu0 2
      %532 = vperm.xlu0 %531, %v308
      %v533 = vpop.permute.xlu0 %532
      %535 = vset.pattern.permute.xlu0 2
      %536 = vperm.xlu0 %535, %v309
      %v537 = vpop.permute.xlu0 %536
      %v539 = vperm.slane %v301, 2
      %v540 = vperm.slane %v301, 6
      %v543 = vperm.slane %v539, 2
      %v544 = vperm.slane %v540, 2
      %v545 = vmul.f32 %v509, %v543
      %v546 = vmul.f32 %v509, %v544
      %v547 = vmul.f32 %v513, %v543
      %v548 = vmul.f32 %v513, %v544
      %v549 = vmul.f32 %v517, %v543
      %v550 = vmul.f32 %v517, %v544
      %v551 = vmul.f32 %v521, %v543
      %v552 = vmul.f32 %v521, %v544
      %v553 = vmul.f32 %v525, %v543
      %v554 = vmul.f32 %v525, %v544
      %v555 = vmul.f32 %v529, %v543
      %v556 = vmul.f32 %v529, %v544
      %v557 = vmul.f32 %v533, %v543
      %v558 = vmul.f32 %v533, %v544
      %v559 = vmul.f32 %v537, %v543
      %v560 = vmul.f32 %v537, %v544
      %v561 = vadd.f32 %v491, %v545
      %v562 = vadd.f32 %v492, %v546
      %v563 = vadd.f32 %v493, %v547
      %v564 = vadd.f32 %v494, %v548
      %v565 = vadd.f32 %v495, %v549
      %v566 = vadd.f32 %v496, %v550
      %v567 = vadd.f32 %v497, %v551
      %v568 = vadd.f32 %v498, %v552
      %v569 = vadd.f32 %v499, %v553
      %v570 = vadd.f32 %v500, %v554
      %v571 = vadd.f32 %v501, %v555
      %v572 = vadd.f32 %v502, %v556
      %v573 = vadd.f32 %v503, %v557
      %v574 = vadd.f32 %v504, %v558
      %v575 = vadd.f32 %v505, %v559
      %v576 = vadd.f32 %v506, %v560
      %577 = vset.pattern.permute.xlu0 3
      %578 = vperm.xlu0 %577, %v302
      %v579 = vpop.permute.xlu0 %578
      %581 = vset.pattern.permute.xlu0 3
      %582 = vperm.xlu0 %581, %v303
      %v583 = vpop.permute.xlu0 %582
      %585 = vset.pattern.permute.xlu0 3
      %586 = vperm.xlu0 %585, %v304
      %v587 = vpop.permute.xlu0 %586
      %589 = vset.pattern.permute.xlu0 3
      %590 = vperm.xlu0 %589, %v305
      %v591 = vpop.permute.xlu0 %590
      %593 = vset.pattern.permute.xlu0 3
      %594 = vperm.xlu0 %593, %v306
      %v595 = vpop.permute.xlu0 %594
      %597 = vset.pattern.permute.xlu0 3
      %598 = vperm.xlu0 %597, %v307
      %v599 = vpop.permute.xlu0 %598
      %601 = vset.pattern.permute.xlu0 3
      %602 = vperm.xlu0 %601, %v308
      %v603 = vpop.permute.xlu0 %602
      %605 = vset.pattern.permute.xlu0 3
      %606 = vperm.xlu0 %605, %v309
      %v607 = vpop.permute.xlu0 %606
      %v609 = vperm.slane %v301, 3
      %v610 = vperm.slane %v301, 7
      %v613 = vperm.slane %v609, 3
      %v614 = vperm.slane %v610, 3
      %v615 = vmul.f32 %v579, %v613
      %v616 = vmul.f32 %v579, %v614
      %v617 = vmul.f32 %v583, %v613
      %v618 = vmul.f32 %v583, %v614
      %v619 = vmul.f32 %v587, %v613
      %v620 = vmul.f32 %v587, %v614
      %v621 = vmul.f32 %v591, %v613
      %v622 = vmul.f32 %v591, %v614
      %v623 = vmul.f32 %v595, %v613
      %v624 = vmul.f32 %v595, %v614
      %v625 = vmul.f32 %v599, %v613
      %v626 = vmul.f32 %v599, %v614
      %v627 = vmul.f32 %v603, %v613
      %v628 = vmul.f32 %v603, %v614
      %v629 = vmul.f32 %v607, %v613
      %v630 = vmul.f32 %v607, %v614
      %v631 = vadd.f32 %v561, %v615
      %v632 = vadd.f32 %v562, %v616
      %v633 = vadd.f32 %v563, %v617
      %v634 = vadd.f32 %v564, %v618
      %v635 = vadd.f32 %v565, %v619
      %v636 = vadd.f32 %v566, %v620
      %v637 = vadd.f32 %v567, %v621
      %v638 = vadd.f32 %v568, %v622
      %v639 = vadd.f32 %v569, %v623
      %v640 = vadd.f32 %v570, %v624
      %v641 = vadd.f32 %v571, %v625
      %v642 = vadd.f32 %v572, %v626
      %v643 = vadd.f32 %v573, %v627
      %v644 = vadd.f32 %v574, %v628
      %v645 = vadd.f32 %v575, %v629
      %v646 = vadd.f32 %v576, %v630
      %vm647 = vcmp.gt.f32.partialorder %v631, 0.0
      %vm648 = vcmp.gt.f32.partialorder %v632, 0.0
      %vm649 = vcmp.gt.f32.partialorder %v633, 0.0
      %vm650 = vcmp.gt.f32.partialorder %v634, 0.0
      %vm651 = vcmp.gt.f32.partialorder %v635, 0.0
      %vm652 = vcmp.gt.f32.partialorder %v636, 0.0
      %vm653 = vcmp.gt.f32.partialorder %v637, 0.0
      %vm654 = vcmp.gt.f32.partialorder %v638, 0.0
      %vm655 = vcmp.gt.f32.partialorder %v639, 0.0
      %vm656 = vcmp.gt.f32.partialorder %v640, 0.0
      %vm657 = vcmp.gt.f32.partialorder %v641, 0.0
      %vm658 = vcmp.gt.f32.partialorder %v642, 0.0
      %vm659 = vcmp.gt.f32.partialorder %v643, 0.0
      %vm660 = vcmp.gt.f32.partialorder %v644, 0.0
      %vm661 = vcmp.gt.f32.partialorder %v645, 0.0
      %vm662 = vcmp.gt.f32.partialorder %v646, 0.0
      %v663 = vmul.f32 %v631, 0.2
      %v664 = vmul.f32 %v632, 0.2
      %v665 = vmul.f32 %v633, 0.2
      %v666 = vmul.f32 %v634, 0.2
      %v667 = vmul.f32 %v635, 0.2
      %v668 = vmul.f32 %v636, 0.2
      %v669 = vmul.f32 %v637, 0.2
      %v670 = vmul.f32 %v638, 0.2
      %v671 = vmul.f32 %v639, 0.2
      %v672 = vmul.f32 %v640, 0.2
      %v673 = vmul.f32 %v641, 0.2
      %v674 = vmul.f32 %v642, 0.2
      %v675 = vmul.f32 %v643, 0.2
      %v676 = vmul.f32 %v644, 0.2
      %v677 = vmul.f32 %v645, 0.2
      %v678 = vmul.f32 %v646, 0.2
      %v679 = vsel %vm647, %v631, %v663
      %v680 = vsel %vm648, %v632, %v664
      %v681 = vsel %vm649, %v633, %v665
      %v682 = vsel %vm650, %v634, %v666
      %v683 = vsel %vm651, %v635, %v667
      %v684 = vsel %vm652, %v636, %v668
      %v685 = vsel %vm653, %v637, %v669
      %v686 = vsel %vm654, %v638, %v670
      %v687 = vsel %vm655, %v639, %v671
      %v688 = vsel %vm656, %v640, %v672
      %v689 = vsel %vm657, %v641, %v673
      %v690 = vsel %vm658, %v642, %v674
      %v691 = vsel %vm659, %v643, %v675
      %v692 = vsel %vm660, %v644, %v676
      %v693 = vsel %vm661, %v645, %v677
      %v694 = vsel %vm662, %v646, %v678
      %v695 = vld [vmem:[%s3] sm:$0xff]
      %v696 = vld [vmem:[%s3 + $0x8] sm:$0xff]
      %v697 = vld [vmem:[%s3 + $0x10] sm:$0xff]
      %v698 = vld [vmem:[%s3 + $0x18] sm:$0xff]
      %v699 = vld [vmem:[%s3 + $0x20] sm:$0xff]
      %v700 = vld [vmem:[%s3 + $0x28] sm:$0xff]
      %v701 = vld [vmem:[%s3 + $0x30] sm:$0xff]
      %v702 = vld [vmem:[%s3 + $0x38] sm:$0xff]
      %v703 = vld [vmem:[%s3 + $0x40] sm:$0xff]
      %v704 = vld [vmem:[%s3 + $0x48] sm:$0xff]
      %v705 = vld [vmem:[%s3 + $0x50] sm:$0xff]
      %v706 = vld [vmem:[%s3 + $0x58] sm:$0xff]
      %v707 = vld [vmem:[%s3 + $0x60] sm:$0xff]
      %v708 = vld [vmem:[%s3 + $0x68] sm:$0xff]
      %v709 = vld [vmem:[%s3 + $0x70] sm:$0xff]
      %v710 = vld [vmem:[%s3 + $0x78] sm:$0xff]
      %vm711 = vcmask 523264
      %v713 = vsel %vm711, %v695, 0
      %v716 = vsel %vm711, %v696, 0
      %v719 = vsel %vm711, %v697, 0
      %v722 = vsel %vm711, %v698, 0
      %v725 = vsel %vm711, %v699, 0
      %v728 = vsel %vm711, %v700, 0
      %v731 = vsel %vm711, %v701, 0
      %v734 = vsel %vm711, %v702, 0
      %v737 = vsel %vm711, %v703, 0
      %v740 = vsel %vm711, %v704, 0
      %v743 = vsel %vm711, %v705, 0
      %v746 = vsel %vm711, %v706, 0
      %v749 = vsel %vm711, %v707, 0
      %v752 = vsel %vm711, %v708, 0
      %v755 = vsel %vm711, %v709, 0
      %v758 = vsel %vm711, %v710, 0
      %760 = vmatpush.msra.mxu0 0.0
      %761 = vmatpush.msra.mxu0 0.0
      %762 = vmatpush.msra.mxu0 0.0
      %763 = vmatpush.msra.mxu0 0.0
      %764 = vmatpush.msra.mxu0 0.0
      %765 = vmatpush.msra.mxu0 0.0
      %766 = vmatpush.msra.mxu0 0.0
      %767 = vmatpush.msra.mxu0 0.0
      %768 = vmatpush.msra.mxu0 %v693
      %769 = vmatpush.msra.mxu0 %v691
      %770 = vmatpush.msra.mxu0 %v689
      %771 = vmatpush.msra.mxu0 %v687
      %772 = vmatpush.msra.mxu0 %v685
      %773 = vmatpush.msra.mxu0 %v683
      %774 = vmatpush.msra.mxu0 %v681
      %775 = vmatpush.msra.mxu0 %v679
      %776 = vmatmul.f32.gmra.mxu0 %v713
      %v777 = vpop.f32.mrf.mxu0
      %v778 = vadd.f32 0.0, %v777
      %779 = vmatmul.f32.gmra.mxu0 %v716
      %v780 = vpop.f32.mrf.mxu0
      %v781 = vadd.f32 0.0, %v780
      %782 = vmatmul.f32.gmra.mxu0 %v719
      %v783 = vpop.f32.mrf.mxu0
      %v784 = vadd.f32 0.0, %v783
      %785 = vmatmul.f32.gmra.mxu0 %v722
      %v786 = vpop.f32.mrf.mxu0
      %v787 = vadd.f32 0.0, %v786
      %788 = vmatmul.f32.gmra.mxu0 %v725
      %v789 = vpop.f32.mrf.mxu0
      %v790 = vadd.f32 0.0, %v789
      %791 = vmatmul.f32.gmra.mxu0 %v728
      %v792 = vpop.f32.mrf.mxu0
      %v793 = vadd.f32 0.0, %v792
      %794 = vmatmul.f32.gmra.mxu0 %v731
      %v795 = vpop.f32.mrf.mxu0
      %v796 = vadd.f32 0.0, %v795
      %797 = vmatmul.f32.gmra.mxu0 %v734
      %v798 = vpop.f32.mrf.mxu0
      %v799 = vadd.f32 0.0, %v798
      %800 = vmatmul.f32.gmra.mxu0 %v737
      %v801 = vpop.f32.mrf.mxu0
      %v802 = vadd.f32 0.0, %v801
      %803 = vmatmul.f32.gmra.mxu0 %v740
      %v804 = vpop.f32.mrf.mxu0
      %v805 = vadd.f32 0.0, %v804
      %806 = vmatmul.f32.gmra.mxu0 %v743
      %v807 = vpop.f32.mrf.mxu0
      %v808 = vadd.f32 0.0, %v807
      %809 = vmatmul.f32.gmra.mxu0 %v746
      %v810 = vpop.f32.mrf.mxu0
      %v811 = vadd.f32 0.0, %v810
      %812 = vmatmul.f32.gmra.mxu0 %v749
      %v813 = vpop.f32.mrf.mxu0
      %v814 = vadd.f32 0.0, %v813
      %815 = vmatmul.f32.gmra.mxu0 %v752
      %v816 = vpop.f32.mrf.mxu0
      %v817 = vadd.f32 0.0, %v816
      %818 = vmatmul.f32.gmra.mxu0 %v755
      %v819 = vpop.f32.mrf.mxu0
      %v820 = vadd.f32 0.0, %v819
      %821 = vmatmul.f32.gmra.mxu0 %v758
      %v822 = vpop.f32.mrf.mxu0
      %v823 = vadd.f32 0.0, %v822
      %824 = vdwg.mxu0
      %825 = vmatpush.msra.mxu0 0.0
      %826 = vmatpush.msra.mxu0 0.0
      %827 = vmatpush.msra.mxu0 0.0
      %828 = vmatpush.msra.mxu0 0.0
      %829 = vmatpush.msra.mxu0 0.0
      %830 = vmatpush.msra.mxu0 0.0
      %831 = vmatpush.msra.mxu0 0.0
      %832 = vmatpush.msra.mxu0 0.0
      %833 = vmatpush.msra.mxu0 %v694
      %834 = vmatpush.msra.mxu0 %v692
      %835 = vmatpush.msra.mxu0 %v690
      %836 = vmatpush.msra.mxu0 %v688
      %837 = vmatpush.msra.mxu0 %v686
      %838 = vmatpush.msra.mxu0 %v684
      %839 = vmatpush.msra.mxu0 %v682
      %840 = vmatpush.msra.mxu0 %v680
      %841 = vmatmul.f32.gmra.mxu0 %v713
      %v842 = vpop.f32.mrf.mxu0
      %v843 = vadd.f32 0.0, %v842
      %844 = vmatmul.f32.gmra.mxu0 %v716
      %v845 = vpop.f32.mrf.mxu0
      %v846 = vadd.f32 0.0, %v845
      %847 = vmatmul.f32.gmra.mxu0 %v719
      %v848 = vpop.f32.mrf.mxu0
      %v849 = vadd.f32 0.0, %v848
      %850 = vmatmul.f32.gmra.mxu0 %v722
      %v851 = vpop.f32.mrf.mxu0
      %v852 = vadd.f32 0.0, %v851
      %853 = vmatmul.f32.gmra.mxu0 %v725
      %v854 = vpop.f32.mrf.mxu0
      %v855 = vadd.f32 0.0, %v854
      %856 = vmatmul.f32.gmra.mxu0 %v728
      %v857 = vpop.f32.mrf.mxu0
      %v858 = vadd.f32 0.0, %v857
      %859 = vmatmul.f32.gmra.mxu0 %v731
      %v860 = vpop.f32.mrf.mxu0
      %v861 = vadd.f32 0.0, %v860
      %862 = vmatmul.f32.gmra.mxu0 %v734
      %v863 = vpop.f32.mrf.mxu0
      %v864 = vadd.f32 0.0, %v863
      %865 = vmatmul.f32.gmra.mxu0 %v737
      %v866 = vpop.f32.mrf.mxu0
      %v867 = vadd.f32 0.0, %v866
      %868 = vmatmul.f32.gmra.mxu0 %v740
      %v869 = vpop.f32.mrf.mxu0
      %v870 = vadd.f32 0.0, %v869
      %871 = vmatmul.f32.gmra.mxu0 %v743
      %v872 = vpop.f32.mrf.mxu0
      %v873 = vadd.f32 0.0, %v872
      %874 = vmatmul.f32.gmra.mxu0 %v746
      %v875 = vpop.f32.mrf.mxu0
      %v876 = vadd.f32 0.0, %v875
      %877 = vmatmul.f32.gmra.mxu0 %v749
      %v878 = vpop.f32.mrf.mxu0
      %v879 = vadd.f32 0.0, %v878
      %880 = vmatmul.f32.gmra.mxu0 %v752
      %v881 = vpop.f32.mrf.mxu0
      %v882 = vadd.f32 0.0, %v881
      %883 = vmatmul.f32.gmra.mxu0 %v755
      %v884 = vpop.f32.mrf.mxu0
      %v885 = vadd.f32 0.0, %v884
      %886 = vmatmul.f32.gmra.mxu0 %v758
      %v887 = vpop.f32.mrf.mxu0
      %v888 = vadd.f32 0.0, %v887
      %889 = vdwg.mxu0
      %v890 = vlaneseq
      %v891 = vand.u32 %v890, 127
      %v892 = vadd.s32 %v891, 128
      %s893 = smul.u32 %s19, 256
      %v894 = vstv %s893
      %v895 = vadd.s32 %v891, %v894
      %v896 = vadd.s32 %v892, %v894
      %vm897 = vcmp.lt.s32.totalorder %v895, 512
      %vm898 = vcmp.lt.s32.totalorder %v896, 512
      %v899 = vsel %vm897, 1, 0
      %v900 = vsel %vm898, 1, 0
      %v901 = vcvt.s32.f32 %v899
      %v902 = vcvt.s32.f32 %v900
      %v903 = vmul.f32 %v778, %v901
      %v904 = vmul.f32 %v843, %v902
      %v905 = vmul.f32 %v781, %v901
      %v906 = vmul.f32 %v846, %v902
      %v907 = vmul.f32 %v784, %v901
      %v908 = vmul.f32 %v849, %v902
      %v909 = vmul.f32 %v787, %v901
      %v910 = vmul.f32 %v852, %v902
      %v911 = vmul.f32 %v790, %v901
      %v912 = vmul.f32 %v855, %v902
      %v913 = vmul.f32 %v793, %v901
      %v914 = vmul.f32 %v858, %v902
      %v915 = vmul.f32 %v796, %v901
      %v916 = vmul.f32 %v861, %v902
      %v917 = vmul.f32 %v799, %v901
      %v918 = vmul.f32 %v864, %v902
      %v919 = vmul.f32 %v802, %v901
      %v920 = vmul.f32 %v867, %v902
      %v921 = vmul.f32 %v805, %v901
      %v922 = vmul.f32 %v870, %v902
      %v923 = vmul.f32 %v808, %v901
      %v924 = vmul.f32 %v873, %v902
      %v925 = vmul.f32 %v811, %v901
      %v926 = vmul.f32 %v876, %v902
      %v927 = vmul.f32 %v814, %v901
      %v928 = vmul.f32 %v879, %v902
      %v929 = vmul.f32 %v817, %v901
      %v930 = vmul.f32 %v882, %v902
      %v931 = vmul.f32 %v820, %v901
      %v932 = vmul.f32 %v885, %v902
      %v933 = vmul.f32 %v823, %v901
      %v934 = vmul.f32 %v888, %v902
      %v935 = vld [vmem:[%s6] sm:$0xff]
      %v936 = vld [vmem:[%s6 + $0x8] sm:$0xff]
      %v937 = vld [vmem:[%s6 + $0x10] sm:$0xff]
      %v938 = vld [vmem:[%s6 + $0x18] sm:$0xff]
      %v939 = vld [vmem:[%s6 + $0x20] sm:$0xff]
      %v940 = vld [vmem:[%s6 + $0x28] sm:$0xff]
      %v941 = vld [vmem:[%s6 + $0x30] sm:$0xff]
      %v942 = vld [vmem:[%s6 + $0x38] sm:$0xff]
      %v943 = vld [vmem:[%s6 + $0x40] sm:$0xff]
      %v944 = vld [vmem:[%s6 + $0x48] sm:$0xff]
      %v945 = vld [vmem:[%s6 + $0x50] sm:$0xff]
      %v946 = vld [vmem:[%s6 + $0x58] sm:$0xff]
      %v947 = vld [vmem:[%s6 + $0x60] sm:$0xff]
      %v948 = vld [vmem:[%s6 + $0x68] sm:$0xff]
      %v949 = vld [vmem:[%s6 + $0x70] sm:$0xff]
      %v950 = vld [vmem:[%s6 + $0x78] sm:$0xff]
      %v951 = vadd.f32 %v903, %v904
      %952 = vadd.xlane.f32.xlu0 %v951
      %v953 = vpop.xlane.xlu0 %952
      %v954 = vadd.f32 %v905, %v906
      %955 = vadd.xlane.f32.xlu0 %v954
      %v956 = vpop.xlane.xlu0 %955
      %v957 = vadd.f32 %v907, %v908
      %958 = vadd.xlane.f32.xlu0 %v957
      %v959 = vpop.xlane.xlu0 %958
      %v960 = vadd.f32 %v909, %v910
      %961 = vadd.xlane.f32.xlu0 %v960
      %v962 = vpop.xlane.xlu0 %961
      %v963 = vadd.f32 %v911, %v912
      %964 = vadd.xlane.f32.xlu0 %v963
      %v965 = vpop.xlane.xlu0 %964
      %v966 = vadd.f32 %v913, %v914
      %967 = vadd.xlane.f32.xlu0 %v966
      %v968 = vpop.xlane.xlu0 %967
      %v969 = vadd.f32 %v915, %v916
      %970 = vadd.xlane.f32.xlu0 %v969
      %v971 = vpop.xlane.xlu0 %970
      %v972 = vadd.f32 %v917, %v918
      %973 = vadd.xlane.f32.xlu0 %v972
      %v974 = vpop.xlane.xlu0 %973
      %v975 = vadd.f32 %v919, %v920
      %976 = vadd.xlane.f32.xlu0 %v975
      %v977 = vpop.xlane.xlu0 %976
      %v978 = vadd.f32 %v921, %v922
      %979 = vadd.xlane.f32.xlu0 %v978
      %v980 = vpop.xlane.xlu0 %979
      %v981 = vadd.f32 %v923, %v924
      %982 = vadd.xlane.f32.xlu0 %v981
      %v983 = vpop.xlane.xlu0 %982
      %v984 = vadd.f32 %v925, %v926
      %985 = vadd.xlane.f32.xlu0 %v984
      %v986 = vpop.xlane.xlu0 %985
      %v987 = vadd.f32 %v927, %v928
      %988 = vadd.xlane.f32.xlu0 %v987
      %v989 = vpop.xlane.xlu0 %988
      %v990 = vadd.f32 %v929, %v930
      %991 = vadd.xlane.f32.xlu0 %v990
      %v992 = vpop.xlane.xlu0 %991
      %v993 = vadd.f32 %v931, %v932
      %994 = vadd.xlane.f32.xlu0 %v993
      %v995 = vpop.xlane.xlu0 %994
      %v996 = vadd.f32 %v933, %v934
      %997 = vadd.xlane.f32.xlu0 %v996
      %v998 = vpop.xlane.xlu0 %997
      %v999 = vadd.f32 %v935, %v953
      %v1000 = vadd.f32 %v936, %v956
      %v1001 = vadd.f32 %v937, %v959
      %v1002 = vadd.f32 %v938, %v962
      %v1003 = vadd.f32 %v939, %v965
      %v1004 = vadd.f32 %v940, %v968
      %v1005 = vadd.f32 %v941, %v971
      %v1006 = vadd.f32 %v942, %v974
      %v1007 = vadd.f32 %v943, %v977
      %v1008 = vadd.f32 %v944, %v980
      %v1009 = vadd.f32 %v945, %v983
      %v1010 = vadd.f32 %v946, %v986
      %v1011 = vadd.f32 %v947, %v989
      %v1012 = vadd.f32 %v948, %v992
      %v1013 = vadd.f32 %v949, %v995
      %v1014 = vadd.f32 %v950, %v998
      %vm1015 = vcmask 7168
      %1016 = vst.msk [vmem:[%s6] sm:$0xff] %vm1015, %v999
      %1017 = vst.msk [vmem:[%s6 + $0x8] sm:$0xff] %vm1015, %v1000
      %1018 = vst.msk [vmem:[%s6 + $0x10] sm:$0xff] %vm1015, %v1001
      %1019 = vst.msk [vmem:[%s6 + $0x18] sm:$0xff] %vm1015, %v1002
      %1020 = vst.msk [vmem:[%s6 + $0x20] sm:$0xff] %vm1015, %v1003
      %1021 = vst.msk [vmem:[%s6 + $0x28] sm:$0xff] %vm1015, %v1004
      %1022 = vst.msk [vmem:[%s6 + $0x30] sm:$0xff] %vm1015, %v1005
      %1023 = vst.msk [vmem:[%s6 + $0x38] sm:$0xff] %vm1015, %v1006
      %1024 = vst.msk [vmem:[%s6 + $0x40] sm:$0xff] %vm1015, %v1007
      %1025 = vst.msk [vmem:[%s6 + $0x48] sm:$0xff] %vm1015, %v1008
      %1026 = vst.msk [vmem:[%s6 + $0x50] sm:$0xff] %vm1015, %v1009
      %1027 = vst.msk [vmem:[%s6 + $0x58] sm:$0xff] %vm1015, %v1010
      %1028 = vst.msk [vmem:[%s6 + $0x60] sm:$0xff] %vm1015, %v1011
      %1029 = vst.msk [vmem:[%s6 + $0x68] sm:$0xff] %vm1015, %v1012
      %1030 = vst.msk [vmem:[%s6 + $0x70] sm:$0xff] %vm1015, %v1013
      %1031 = vst.msk [vmem:[%s6 + $0x78] sm:$0xff] %vm1015, %v1014
      %v1032 = vld [vmem:[%s7] sm:$0xff]
      %v1033 = vld [vmem:[%s7 + $0x8] sm:$0xff]
      %v1034 = vld [vmem:[%s7 + $0x10] sm:$0xff]
      %v1035 = vld [vmem:[%s7 + $0x18] sm:$0xff]
      %v1036 = vld [vmem:[%s7 + $0x20] sm:$0xff]
      %v1037 = vld [vmem:[%s7 + $0x28] sm:$0xff]
      %v1038 = vld [vmem:[%s7 + $0x30] sm:$0xff]
      %v1039 = vld [vmem:[%s7 + $0x38] sm:$0xff]
      %v1040 = vld [vmem:[%s7 + $0x40] sm:$0xff]
      %v1041 = vld [vmem:[%s7 + $0x48] sm:$0xff]
      %v1042 = vld [vmem:[%s7 + $0x50] sm:$0xff]
      %v1043 = vld [vmem:[%s7 + $0x58] sm:$0xff]
      %v1044 = vld [vmem:[%s7 + $0x60] sm:$0xff]
      %v1045 = vld [vmem:[%s7 + $0x68] sm:$0xff]
      %v1046 = vld [vmem:[%s7 + $0x70] sm:$0xff]
      %v1047 = vld [vmem:[%s7 + $0x78] sm:$0xff]
      %v1048 = vmul.f32 %v903, %v903
      %v1049 = vmul.f32 %v904, %v904
      %v1050 = vmul.f32 %v905, %v905
      %v1051 = vmul.f32 %v906, %v906
      %v1052 = vmul.f32 %v907, %v907
      %v1053 = vmul.f32 %v908, %v908
      %v1054 = vmul.f32 %v909, %v909
      %v1055 = vmul.f32 %v910, %v910
      %v1056 = vmul.f32 %v911, %v911
      %v1057 = vmul.f32 %v912, %v912
      %v1058 = vmul.f32 %v913, %v913
      %v1059 = vmul.f32 %v914, %v914
      %v1060 = vmul.f32 %v915, %v915
      %v1061 = vmul.f32 %v916, %v916
      %v1062 = vmul.f32 %v917, %v917
      %v1063 = vmul.f32 %v918, %v918
      %v1064 = vmul.f32 %v919, %v919
      %v1065 = vmul.f32 %v920, %v920
      %v1066 = vmul.f32 %v921, %v921
      %v1067 = vmul.f32 %v922, %v922
      %v1068 = vmul.f32 %v923, %v923
      %v1069 = vmul.f32 %v924, %v924
      %v1070 = vmul.f32 %v925, %v925
      %v1071 = vmul.f32 %v926, %v926
      %v1072 = vmul.f32 %v927, %v927
      %v1073 = vmul.f32 %v928, %v928
      %v1074 = vmul.f32 %v929, %v929
      %v1075 = vmul.f32 %v930, %v930
      %v1076 = vmul.f32 %v931, %v931
      %v1077 = vmul.f32 %v932, %v932
      %v1078 = vmul.f32 %v933, %v933
      %v1079 = vmul.f32 %v934, %v934
      %v1080 = vadd.f32 %v1048, %v1049
      %1081 = vadd.xlane.f32.xlu0 %v1080
      %v1082 = vpop.xlane.xlu0 %1081
      %v1083 = vadd.f32 %v1050, %v1051
      %1084 = vadd.xlane.f32.xlu0 %v1083
      %v1085 = vpop.xlane.xlu0 %1084
      %v1086 = vadd.f32 %v1052, %v1053
      %1087 = vadd.xlane.f32.xlu0 %v1086
      %v1088 = vpop.xlane.xlu0 %1087
      %v1089 = vadd.f32 %v1054, %v1055
      %1090 = vadd.xlane.f32.xlu0 %v1089
      %v1091 = vpop.xlane.xlu0 %1090
      %v1092 = vadd.f32 %v1056, %v1057
      %1093 = vadd.xlane.f32.xlu0 %v1092
      %v1094 = vpop.xlane.xlu0 %1093
      %v1095 = vadd.f32 %v1058, %v1059
      %1096 = vadd.xlane.f32.xlu0 %v1095
      %v1097 = vpop.xlane.xlu0 %1096
      %v1098 = vadd.f32 %v1060, %v1061
      %1099 = vadd.xlane.f32.xlu0 %v1098
      %v1100 = vpop.xlane.xlu0 %1099
      %v1101 = vadd.f32 %v1062, %v1063
      %1102 = vadd.xlane.f32.xlu0 %v1101
      %v1103 = vpop.xlane.xlu0 %1102
      %v1104 = vadd.f32 %v1064, %v1065
      %1105 = vadd.xlane.f32.xlu0 %v1104
      %v1106 = vpop.xlane.xlu0 %1105
      %v1107 = vadd.f32 %v1066, %v1067
      %1108 = vadd.xlane.f32.xlu0 %v1107
      %v1109 = vpop.xlane.xlu0 %1108
      %v1110 = vadd.f32 %v1068, %v1069
      %1111 = vadd.xlane.f32.xlu0 %v1110
      %v1112 = vpop.xlane.xlu0 %1111
      %v1113 = vadd.f32 %v1070, %v1071
      %1114 = vadd.xlane.f32.xlu0 %v1113
      %v1115 = vpop.xlane.xlu0 %1114
      %v1116 = vadd.f32 %v1072, %v1073
      %1117 = vadd.xlane.f32.xlu0 %v1116
      %v1118 = vpop.xlane.xlu0 %1117
      %v1119 = vadd.f32 %v1074, %v1075
      %1120 = vadd.xlane.f32.xlu0 %v1119
      %v1121 = vpop.xlane.xlu0 %1120
      %v1122 = vadd.f32 %v1076, %v1077
      %1123 = vadd.xlane.f32.xlu0 %v1122
      %v1124 = vpop.xlane.xlu0 %1123
      %v1125 = vadd.f32 %v1078, %v1079
      %1126 = vadd.xlane.f32.xlu0 %v1125
      %v1127 = vpop.xlane.xlu0 %1126
      %v1128 = vadd.f32 %v1032, %v1082
      %v1129 = vadd.f32 %v1033, %v1085
      %v1130 = vadd.f32 %v1034, %v1088
      %v1131 = vadd.f32 %v1035, %v1091
      %v1132 = vadd.f32 %v1036, %v1094
      %v1133 = vadd.f32 %v1037, %v1097
      %v1134 = vadd.f32 %v1038, %v1100
      %v1135 = vadd.f32 %v1039, %v1103
      %v1136 = vadd.f32 %v1040, %v1106
      %v1137 = vadd.f32 %v1041, %v1109
      %v1138 = vadd.f32 %v1042, %v1112
      %v1139 = vadd.f32 %v1043, %v1115
      %v1140 = vadd.f32 %v1044, %v1118
      %v1141 = vadd.f32 %v1045, %v1121
      %v1142 = vadd.f32 %v1046, %v1124
      %v1143 = vadd.f32 %v1047, %v1127
      %1144 = vst.msk [vmem:[%s7] sm:$0xff] %vm1015, %v1128
      %1145 = vst.msk [vmem:[%s7 + $0x8] sm:$0xff] %vm1015, %v1129
      %1146 = vst.msk [vmem:[%s7 + $0x10] sm:$0xff] %vm1015, %v1130
      %1147 = vst.msk [vmem:[%s7 + $0x18] sm:$0xff] %vm1015, %v1131
      %1148 = vst.msk [vmem:[%s7 + $0x20] sm:$0xff] %vm1015, %v1132
      %1149 = vst.msk [vmem:[%s7 + $0x28] sm:$0xff] %vm1015, %v1133
      %1150 = vst.msk [vmem:[%s7 + $0x30] sm:$0xff] %vm1015, %v1134
      %1151 = vst.msk [vmem:[%s7 + $0x38] sm:$0xff] %vm1015, %v1135
      %1152 = vst.msk [vmem:[%s7 + $0x40] sm:$0xff] %vm1015, %v1136
      %1153 = vst.msk [vmem:[%s7 + $0x48] sm:$0xff] %vm1015, %v1137
      %1154 = vst.msk [vmem:[%s7 + $0x50] sm:$0xff] %vm1015, %v1138
      %1155 = vst.msk [vmem:[%s7 + $0x58] sm:$0xff] %vm1015, %v1139
      %1156 = vst.msk [vmem:[%s7 + $0x60] sm:$0xff] %vm1015, %v1140
      %1157 = vst.msk [vmem:[%s7 + $0x68] sm:$0xff] %vm1015, %v1141
      %1158 = vst.msk [vmem:[%s7 + $0x70] sm:$0xff] %vm1015, %v1142
      %1159 = vst.msk [vmem:[%s7 + $0x78] sm:$0xff] %vm1015, %v1143
      %p1160 = scmp.eq.s32.totalorder %s19, 1
      // Predicated region
      $region49: #{tpu_custom_call.1} parent=43 // pred_check
        %p1161 = pneg %p1160
      $region50: #{tpu_custom_call.1} parent=43 // pred_check_branch
        %1163 = sbr.rel (%p1161) target = $region52
      $region51: #{tpu_custom_call.1} parent=43 // pred_region
        %v1164 = vld [vmem:[%s6] sm:$0xff]
        %v1165 = vld [vmem:[%s6 + $0x8] sm:$0xff]
        %v1166 = vld [vmem:[%s6 + $0x10] sm:$0xff]
        %v1167 = vld [vmem:[%s6 + $0x18] sm:$0xff]
        %v1168 = vld [vmem:[%s6 + $0x20] sm:$0xff]
        %v1169 = vld [vmem:[%s6 + $0x28] sm:$0xff]
        %v1170 = vld [vmem:[%s6 + $0x30] sm:$0xff]
        %v1171 = vld [vmem:[%s6 + $0x38] sm:$0xff]
        %v1172 = vld [vmem:[%s6 + $0x40] sm:$0xff]
        %v1173 = vld [vmem:[%s6 + $0x48] sm:$0xff]
        %v1174 = vld [vmem:[%s6 + $0x50] sm:$0xff]
        %v1175 = vld [vmem:[%s6 + $0x58] sm:$0xff]
        %v1176 = vld [vmem:[%s6 + $0x60] sm:$0xff]
        %v1177 = vld [vmem:[%s6 + $0x68] sm:$0xff]
        %v1178 = vld [vmem:[%s6 + $0x70] sm:$0xff]
        %v1179 = vld [vmem:[%s6 + $0x78] sm:$0xff]
        %v1180 = vmul.f32 %v1164, 0.001953125
        %v1181 = vmul.f32 %v1165, 0.001953125
        %v1182 = vmul.f32 %v1166, 0.001953125
        %v1183 = vmul.f32 %v1167, 0.001953125
        %v1184 = vmul.f32 %v1168, 0.001953125
        %v1185 = vmul.f32 %v1169, 0.001953125
        %v1186 = vmul.f32 %v1170, 0.001953125
        %v1187 = vmul.f32 %v1171, 0.001953125
        %v1188 = vmul.f32 %v1172, 0.001953125
        %v1189 = vmul.f32 %v1173, 0.001953125
        %v1190 = vmul.f32 %v1174, 0.001953125
        %v1191 = vmul.f32 %v1175, 0.001953125
        %v1192 = vmul.f32 %v1176, 0.001953125
        %v1193 = vmul.f32 %v1177, 0.001953125
        %v1194 = vmul.f32 %v1178, 0.001953125
        %v1195 = vmul.f32 %v1179, 0.001953125
        %v1196 = vld [vmem:[%s7] sm:$0xff]
        %v1197 = vld [vmem:[%s7 + $0x8] sm:$0xff]
        %v1198 = vld [vmem:[%s7 + $0x10] sm:$0xff]
        %v1199 = vld [vmem:[%s7 + $0x18] sm:$0xff]
        %v1200 = vld [vmem:[%s7 + $0x20] sm:$0xff]
        %v1201 = vld [vmem:[%s7 + $0x28] sm:$0xff]
        %v1202 = vld [vmem:[%s7 + $0x30] sm:$0xff]
        %v1203 = vld [vmem:[%s7 + $0x38] sm:$0xff]
        %v1204 = vld [vmem:[%s7 + $0x40] sm:$0xff]
        %v1205 = vld [vmem:[%s7 + $0x48] sm:$0xff]
        %v1206 = vld [vmem:[%s7 + $0x50] sm:$0xff]
        %v1207 = vld [vmem:[%s7 + $0x58] sm:$0xff]
        %v1208 = vld [vmem:[%s7 + $0x60] sm:$0xff]
        %v1209 = vld [vmem:[%s7 + $0x68] sm:$0xff]
        %v1210 = vld [vmem:[%s7 + $0x70] sm:$0xff]
        %v1211 = vld [vmem:[%s7 + $0x78] sm:$0xff]
        %v1212 = vmul.f32 %v1196, 0.001953125
        %v1213 = vmul.f32 %v1197, 0.001953125
        %v1214 = vmul.f32 %v1198, 0.001953125
        %v1215 = vmul.f32 %v1199, 0.001953125
        %v1216 = vmul.f32 %v1200, 0.001953125
        %v1217 = vmul.f32 %v1201, 0.001953125
        %v1218 = vmul.f32 %v1202, 0.001953125
        %v1219 = vmul.f32 %v1203, 0.001953125
        %v1220 = vmul.f32 %v1204, 0.001953125
        %v1221 = vmul.f32 %v1205, 0.001953125
        %v1222 = vmul.f32 %v1206, 0.001953125
        %v1223 = vmul.f32 %v1207, 0.001953125
        %v1224 = vmul.f32 %v1208, 0.001953125
        %v1225 = vmul.f32 %v1209, 0.001953125
        %v1226 = vmul.f32 %v1210, 0.001953125
        %v1227 = vmul.f32 %v1211, 0.001953125
        %v1228 = vmul.f32 %v1180, %v1180
        %v1229 = vmul.f32 %v1181, %v1181
        %v1230 = vmul.f32 %v1182, %v1182
        %v1231 = vmul.f32 %v1183, %v1183
        %v1232 = vmul.f32 %v1184, %v1184
        %v1233 = vmul.f32 %v1185, %v1185
        %v1234 = vmul.f32 %v1186, %v1186
        %v1235 = vmul.f32 %v1187, %v1187
        %v1236 = vmul.f32 %v1188, %v1188
        %v1237 = vmul.f32 %v1189, %v1189
        %v1238 = vmul.f32 %v1190, %v1190
        %v1239 = vmul.f32 %v1191, %v1191
        %v1240 = vmul.f32 %v1192, %v1192
        %v1241 = vmul.f32 %v1193, %v1193
        %v1242 = vmul.f32 %v1194, %v1194
        %v1243 = vmul.f32 %v1195, %v1195
        %v1244 = vsub.f32 %v1212, %v1228
        %v1245 = vsub.f32 %v1213, %v1229
        %v1246 = vsub.f32 %v1214, %v1230
        %v1247 = vsub.f32 %v1215, %v1231
        %v1248 = vsub.f32 %v1216, %v1232
        %v1249 = vsub.f32 %v1217, %v1233
        %v1250 = vsub.f32 %v1218, %v1234
        %v1251 = vsub.f32 %v1219, %v1235
        %v1252 = vsub.f32 %v1220, %v1236
        %v1253 = vsub.f32 %v1221, %v1237
        %v1254 = vsub.f32 %v1222, %v1238
        %v1255 = vsub.f32 %v1223, %v1239
        %v1256 = vsub.f32 %v1224, %v1240
        %v1257 = vsub.f32 %v1225, %v1241
        %v1258 = vsub.f32 %v1226, %v1242
        %v1259 = vsub.f32 %v1227, %v1243
        %v1260 = vld [vmem:[%s4] sm:$0xff]
        %v1261 = vld [vmem:[%s4 + $0x8] sm:$0xff]
        %v1262 = vld [vmem:[%s4 + $0x10] sm:$0xff]
        %v1263 = vld [vmem:[%s4 + $0x18] sm:$0xff]
        %v1264 = vld [vmem:[%s4 + $0x20] sm:$0xff]
        %v1265 = vld [vmem:[%s4 + $0x28] sm:$0xff]
        %v1266 = vld [vmem:[%s4 + $0x30] sm:$0xff]
        %v1267 = vld [vmem:[%s4 + $0x38] sm:$0xff]
        %v1268 = vld [vmem:[%s4 + $0x40] sm:$0xff]
        %v1269 = vld [vmem:[%s4 + $0x48] sm:$0xff]
        %v1270 = vld [vmem:[%s4 + $0x50] sm:$0xff]
        %v1271 = vld [vmem:[%s4 + $0x58] sm:$0xff]
        %v1272 = vld [vmem:[%s4 + $0x60] sm:$0xff]
        %v1273 = vld [vmem:[%s4 + $0x68] sm:$0xff]
        %v1274 = vld [vmem:[%s4 + $0x70] sm:$0xff]
        %v1275 = vld [vmem:[%s4 + $0x78] sm:$0xff]
        %v1276 = vadd.f32 %v1244, 1e-05
        %v1277 = vadd.f32 %v1245, 1e-05
        %v1278 = vadd.f32 %v1246, 1e-05
        %v1279 = vadd.f32 %v1247, 1e-05
        %v1280 = vadd.f32 %v1248, 1e-05
        %v1281 = vadd.f32 %v1249, 1e-05
        %v1282 = vadd.f32 %v1250, 1e-05
        %v1283 = vadd.f32 %v1251, 1e-05
        %v1284 = vadd.f32 %v1252, 1e-05
        %v1285 = vadd.f32 %v1253, 1e-05
        %v1286 = vadd.f32 %v1254, 1e-05
        %v1287 = vadd.f32 %v1255, 1e-05
        %v1288 = vadd.f32 %v1256, 1e-05
        %v1289 = vadd.f32 %v1257, 1e-05
        %v1290 = vadd.f32 %v1258, 1e-05
        %v1291 = vadd.f32 %v1259, 1e-05
        %v1292 = vrsqrt.pop %v1276
        %v1293 = vmul.f32 %v1292, %v1276
        %v1294 = vmul.f32 %v1293, %v1292
        %v1295 = vmul.f32 0.5, %v1294
        %v1296 = vsub.f32 1.5, %v1295
        %v1297 = vmul.f32 %v1292, %v1296
        %vm1298 = vweird.f32 %v1276
        %vm1299 = vweird.f32 %v1292
        %vm1300 = vmor %vm1298, %vm1299
        %v1301 = vsel %vm1300, %v1292, %v1297
        %v1302 = vrsqrt.pop %v1277
        %v1303 = vmul.f32 %v1302, %v1277
        %v1304 = vmul.f32 %v1303, %v1302
        %v1305 = vmul.f32 0.5, %v1304
        %v1306 = vsub.f32 1.5, %v1305
        %v1307 = vmul.f32 %v1302, %v1306
        %vm1308 = vweird.f32 %v1277
        %vm1309 = vweird.f32 %v1302
        %vm1310 = vmor %vm1308, %vm1309
        %v1311 = vsel %vm1310, %v1302, %v1307
        %v1312 = vrsqrt.pop %v1278
        %v1313 = vmul.f32 %v1312, %v1278
        %v1314 = vmul.f32 %v1313, %v1312
        %v1315 = vmul.f32 0.5, %v1314
        %v1316 = vsub.f32 1.5, %v1315
        %v1317 = vmul.f32 %v1312, %v1316
        %vm1318 = vweird.f32 %v1278
        %vm1319 = vweird.f32 %v1312
        %vm1320 = vmor %vm1318, %vm1319
        %v1321 = vsel %vm1320, %v1312, %v1317
        %v1322 = vrsqrt.pop %v1279
        %v1323 = vmul.f32 %v1322, %v1279
        %v1324 = vmul.f32 %v1323, %v1322
        %v1325 = vmul.f32 0.5, %v1324
        %v1326 = vsub.f32 1.5, %v1325
        %v1327 = vmul.f32 %v1322, %v1326
        %vm1328 = vweird.f32 %v1279
        %vm1329 = vweird.f32 %v1322
        %vm1330 = vmor %vm1328, %vm1329
        %v1331 = vsel %vm1330, %v1322, %v1327
        %v1332 = vrsqrt.pop %v1280
        %v1333 = vmul.f32 %v1332, %v1280
        %v1334 = vmul.f32 %v1333, %v1332
        %v1335 = vmul.f32 0.5, %v1334
        %v1336 = vsub.f32 1.5, %v1335
        %v1337 = vmul.f32 %v1332, %v1336
        %vm1338 = vweird.f32 %v1280
        %vm1339 = vweird.f32 %v1332
        %vm1340 = vmor %vm1338, %vm1339
        %v1341 = vsel %vm1340, %v1332, %v1337
        %v1342 = vrsqrt.pop %v1281
        %v1343 = vmul.f32 %v1342, %v1281
        %v1344 = vmul.f32 %v1343, %v1342
        %v1345 = vmul.f32 0.5, %v1344
        %v1346 = vsub.f32 1.5, %v1345
        %v1347 = vmul.f32 %v1342, %v1346
        %vm1348 = vweird.f32 %v1281
        %vm1349 = vweird.f32 %v1342
        %vm1350 = vmor %vm1348, %vm1349
        %v1351 = vsel %vm1350, %v1342, %v1347
        %v1352 = vrsqrt.pop %v1282
        %v1353 = vmul.f32 %v1352, %v1282
        %v1354 = vmul.f32 %v1353, %v1352
        %v1355 = vmul.f32 0.5, %v1354
        %v1356 = vsub.f32 1.5, %v1355
        %v1357 = vmul.f32 %v1352, %v1356
        %vm1358 = vweird.f32 %v1282
        %vm1359 = vweird.f32 %v1352
        %vm1360 = vmor %vm1358, %vm1359
        %v1361 = vsel %vm1360, %v1352, %v1357
        %v1362 = vrsqrt.pop %v1283
        %v1363 = vmul.f32 %v1362, %v1283
        %v1364 = vmul.f32 %v1363, %v1362
        %v1365 = vmul.f32 0.5, %v1364
        %v1366 = vsub.f32 1.5, %v1365
        %v1367 = vmul.f32 %v1362, %v1366
        %vm1368 = vweird.f32 %v1283
        %vm1369 = vweird.f32 %v1362
        %vm1370 = vmor %vm1368, %vm1369
        %v1371 = vsel %vm1370, %v1362, %v1367
        %v1372 = vrsqrt.pop %v1284
        %v1373 = vmul.f32 %v1372, %v1284
        %v1374 = vmul.f32 %v1373, %v1372
        %v1375 = vmul.f32 0.5, %v1374
        %v1376 = vsub.f32 1.5, %v1375
        %v1377 = vmul.f32 %v1372, %v1376
        %vm1378 = vweird.f32 %v1284
        %vm1379 = vweird.f32 %v1372
        %vm1380 = vmor %vm1378, %vm1379
        %v1381 = vsel %vm1380, %v1372, %v1377
        %v1382 = vrsqrt.pop %v1285
        %v1383 = vmul.f32 %v1382, %v1285
        %v1384 = vmul.f32 %v1383, %v1382
        %v1385 = vmul.f32 0.5, %v1384
        %v1386 = vsub.f32 1.5, %v1385
        %v1387 = vmul.f32 %v1382, %v1386
        %vm1388 = vweird.f32 %v1285
        %vm1389 = vweird.f32 %v1382
        %vm1390 = vmor %vm1388, %vm1389
        %v1391 = vsel %vm1390, %v1382, %v1387
        %v1392 = vrsqrt.pop %v1286
        %v1393 = vmul.f32 %v1392, %v1286
        %v1394 = vmul.f32 %v1393, %v1392
        %v1395 = vmul.f32 0.5, %v1394
        %v1396 = vsub.f32 1.5, %v1395
        %v1397 = vmul.f32 %v1392, %v1396
        %vm1398 = vweird.f32 %v1286
        %vm1399 = vweird.f32 %v1392
        %vm1400 = vmor %vm1398, %vm1399
        %v1401 = vsel %vm1400, %v1392, %v1397
        %v1402 = vrsqrt.pop %v1287
        %v1403 = vmul.f32 %v1402, %v1287
        %v1404 = vmul.f32 %v1403, %v1402
        %v1405 = vmul.f32 0.5, %v1404
        %v1406 = vsub.f32 1.5, %v1405
        %v1407 = vmul.f32 %v1402, %v1406
        %vm1408 = vweird.f32 %v1287
        %vm1409 = vweird.f32 %v1402
        %vm1410 = vmor %vm1408, %vm1409
        %v1411 = vsel %vm1410, %v1402, %v1407
        %v1412 = vrsqrt.pop %v1288
        %v1413 = vmul.f32 %v1412, %v1288
        %v1414 = vmul.f32 %v1413, %v1412
        %v1415 = vmul.f32 0.5, %v1414
        %v1416 = vsub.f32 1.5, %v1415
        %v1417 = vmul.f32 %v1412, %v1416
        %vm1418 = vweird.f32 %v1288
        %vm1419 = vweird.f32 %v1412
        %vm1420 = vmor %vm1418, %vm1419
        %v1421 = vsel %vm1420, %v1412, %v1417
        %v1422 = vrsqrt.pop %v1289
        %v1423 = vmul.f32 %v1422, %v1289
        %v1424 = vmul.f32 %v1423, %v1422
        %v1425 = vmul.f32 0.5, %v1424
        %v1426 = vsub.f32 1.5, %v1425
        %v1427 = vmul.f32 %v1422, %v1426
        %vm1428 = vweird.f32 %v1289
        %vm1429 = vweird.f32 %v1422
        %vm1430 = vmor %vm1428, %vm1429
        %v1431 = vsel %vm1430, %v1422, %v1427
        %v1432 = vrsqrt.pop %v1290
        %v1433 = vmul.f32 %v1432, %v1290
        %v1434 = vmul.f32 %v1433, %v1432
        %v1435 = vmul.f32 0.5, %v1434
        %v1436 = vsub.f32 1.5, %v1435
        %v1437 = vmul.f32 %v1432, %v1436
        %vm1438 = vweird.f32 %v1290
        %vm1439 = vweird.f32 %v1432
        %vm1440 = vmor %vm1438, %vm1439
        %v1441 = vsel %vm1440, %v1432, %v1437
        %v1442 = vrsqrt.pop %v1291
        %v1443 = vmul.f32 %v1442, %v1291
        %v1444 = vmul.f32 %v1443, %v1442
        %v1445 = vmul.f32 0.5, %v1444
        %v1446 = vsub.f32 1.5, %v1445
        %v1447 = vmul.f32 %v1442, %v1446
        %vm1448 = vweird.f32 %v1291
        %vm1449 = vweird.f32 %v1442
        %vm1450 = vmor %vm1448, %vm1449
        %v1451 = vsel %vm1450, %v1442, %v1447
        %v1452 = vmul.f32 %v1260, %v1301
        %v1453 = vmul.f32 %v1261, %v1311
        %v1454 = vmul.f32 %v1262, %v1321
        %v1455 = vmul.f32 %v1263, %v1331
        %v1456 = vmul.f32 %v1264, %v1341
        %v1457 = vmul.f32 %v1265, %v1351
        %v1458 = vmul.f32 %v1266, %v1361
        %v1459 = vmul.f32 %v1267, %v1371
        %v1460 = vmul.f32 %v1268, %v1381
        %v1461 = vmul.f32 %v1269, %v1391
        %v1462 = vmul.f32 %v1270, %v1401
        %v1463 = vmul.f32 %v1271, %v1411
        %v1464 = vmul.f32 %v1272, %v1421
        %v1465 = vmul.f32 %v1273, %v1431
        %v1466 = vmul.f32 %v1274, %v1441
        %v1467 = vmul.f32 %v1275, %v1451
        %1468 = vst.msk [vmem:[%s6] sm:$0xff] %vm1015, %v1452
        %1469 = vst.msk [vmem:[%s6 + $0x8] sm:$0xff] %vm1015, %v1453
        %1470 = vst.msk [vmem:[%s6 + $0x10] sm:$0xff] %vm1015, %v1454
        %1471 = vst.msk [vmem:[%s6 + $0x18] sm:$0xff] %vm1015, %v1455
        %1472 = vst.msk [vmem:[%s6 + $0x20] sm:$0xff] %vm1015, %v1456
        %1473 = vst.msk [vmem:[%s6 + $0x28] sm:$0xff] %vm1015, %v1457
        %1474 = vst.msk [vmem:[%s6 + $0x30] sm:$0xff] %vm1015, %v1458
        %1475 = vst.msk [vmem:[%s6 + $0x38] sm:$0xff] %vm1015, %v1459
        %1476 = vst.msk [vmem:[%s6 + $0x40] sm:$0xff] %vm1015, %v1460
        %1477 = vst.msk [vmem:[%s6 + $0x48] sm:$0xff] %vm1015, %v1461
        %1478 = vst.msk [vmem:[%s6 + $0x50] sm:$0xff] %vm1015, %v1462
        %1479 = vst.msk [vmem:[%s6 + $0x58] sm:$0xff] %vm1015, %v1463
        %1480 = vst.msk [vmem:[%s6 + $0x60] sm:$0xff] %vm1015, %v1464
        %1481 = vst.msk [vmem:[%s6 + $0x68] sm:$0xff] %vm1015, %v1465
        %1482 = vst.msk [vmem:[%s6 + $0x70] sm:$0xff] %vm1015, %v1466
        %1483 = vst.msk [vmem:[%s6 + $0x78] sm:$0xff] %vm1015, %v1467
        %v1484 = vld [vmem:[%s5] sm:$0xff]
        %v1485 = vld [vmem:[%s5 + $0x8] sm:$0xff]
        %v1486 = vld [vmem:[%s5 + $0x10] sm:$0xff]
        %v1487 = vld [vmem:[%s5 + $0x18] sm:$0xff]
        %v1488 = vld [vmem:[%s5 + $0x20] sm:$0xff]
        %v1489 = vld [vmem:[%s5 + $0x28] sm:$0xff]
        %v1490 = vld [vmem:[%s5 + $0x30] sm:$0xff]
        %v1491 = vld [vmem:[%s5 + $0x38] sm:$0xff]
        %v1492 = vld [vmem:[%s5 + $0x40] sm:$0xff]
        %v1493 = vld [vmem:[%s5 + $0x48] sm:$0xff]
        %v1494 = vld [vmem:[%s5 + $0x50] sm:$0xff]
        %v1495 = vld [vmem:[%s5 + $0x58] sm:$0xff]
        %v1496 = vld [vmem:[%s5 + $0x60] sm:$0xff]
        %v1497 = vld [vmem:[%s5 + $0x68] sm:$0xff]
        %v1498 = vld [vmem:[%s5 + $0x70] sm:$0xff]
        %v1499 = vld [vmem:[%s5 + $0x78] sm:$0xff]
        %v1500 = vmul.f32 %v1180, %v1452
        %v1501 = vmul.f32 %v1181, %v1453
        %v1502 = vmul.f32 %v1182, %v1454
        %v1503 = vmul.f32 %v1183, %v1455
        %v1504 = vmul.f32 %v1184, %v1456
        %v1505 = vmul.f32 %v1185, %v1457
        %v1506 = vmul.f32 %v1186, %v1458
        %v1507 = vmul.f32 %v1187, %v1459
        %v1508 = vmul.f32 %v1188, %v1460
        %v1509 = vmul.f32 %v1189, %v1461
        %v1510 = vmul.f32 %v1190, %v1462
        %v1511 = vmul.f32 %v1191, %v1463
        %v1512 = vmul.f32 %v1192, %v1464
        %v1513 = vmul.f32 %v1193, %v1465
        %v1514 = vmul.f32 %v1194, %v1466
        %v1515 = vmul.f32 %v1195, %v1467
        %v1516 = vsub.f32 %v1484, %v1500
        %v1517 = vsub.f32 %v1485, %v1501
        %v1518 = vsub.f32 %v1486, %v1502
        %v1519 = vsub.f32 %v1487, %v1503
        %v1520 = vsub.f32 %v1488, %v1504
        %v1521 = vsub.f32 %v1489, %v1505
        %v1522 = vsub.f32 %v1490, %v1506
        %v1523 = vsub.f32 %v1491, %v1507
        %v1524 = vsub.f32 %v1492, %v1508
        %v1525 = vsub.f32 %v1493, %v1509
        %v1526 = vsub.f32 %v1494, %v1510
        %v1527 = vsub.f32 %v1495, %v1511
        %v1528 = vsub.f32 %v1496, %v1512
        %v1529 = vsub.f32 %v1497, %v1513
        %v1530 = vsub.f32 %v1498, %v1514
        %v1531 = vsub.f32 %v1499, %v1515
        %1532 = vst.msk [vmem:[%s7] sm:$0xff] %vm1015, %v1516
        %1533 = vst.msk [vmem:[%s7 + $0x8] sm:$0xff] %vm1015, %v1517
        %1534 = vst.msk [vmem:[%s7 + $0x10] sm:$0xff] %vm1015, %v1518
        %1535 = vst.msk [vmem:[%s7 + $0x18] sm:$0xff] %vm1015, %v1519
        %1536 = vst.msk [vmem:[%s7 + $0x20] sm:$0xff] %vm1015, %v1520
        %1537 = vst.msk [vmem:[%s7 + $0x28] sm:$0xff] %vm1015, %v1521
        %1538 = vst.msk [vmem:[%s7 + $0x30] sm:$0xff] %vm1015, %v1522
        %1539 = vst.msk [vmem:[%s7 + $0x38] sm:$0xff] %vm1015, %v1523
        %1540 = vst.msk [vmem:[%s7 + $0x40] sm:$0xff] %vm1015, %v1524
        %1541 = vst.msk [vmem:[%s7 + $0x48] sm:$0xff] %vm1015, %v1525
        %1542 = vst.msk [vmem:[%s7 + $0x50] sm:$0xff] %vm1015, %v1526
        %1543 = vst.msk [vmem:[%s7 + $0x58] sm:$0xff] %vm1015, %v1527
        %1544 = vst.msk [vmem:[%s7 + $0x60] sm:$0xff] %vm1015, %v1528
        %1545 = vst.msk [vmem:[%s7 + $0x68] sm:$0xff] %vm1015, %v1529
        %1546 = vst.msk [vmem:[%s7 + $0x70] sm:$0xff] %vm1015, %v1530
        %1547 = vst.msk [vmem:[%s7 + $0x78] sm:$0xff] %vm1015, %v1531
      $region52: #{tpu_custom_call.1} parent=43 // pred_fallthru
        _
      // Predicated region
      $region53: #{tpu_custom_call.1} parent=43 // pred_check
        %p1548 = pneg %p163
      $region54: #{tpu_custom_call.1} parent=43 // pred_check_branch
        %1550 = sbr.rel (%p1548) target = $region56
      $region55: #{tpu_custom_call.1} parent=43 // pred_region
        _
      $region56: #{tpu_custom_call.1} parent=43 // pred_fallthru
        _
      // Predicated region
      $region57: #{tpu_custom_call.1} parent=43 // pred_check
        %p1551 = pneg %p184
      $region58: #{tpu_custom_call.1} parent=43 // pred_check_branch
        %1553 = sbr.rel (%p1551) target = $region60
      $region59: #{tpu_custom_call.1} parent=43 // pred_region
        _
      $region60: #{tpu_custom_call.1} parent=43 // pred_fallthru
        _
      // Predicated region
      $region61: #{tpu_custom_call.1} parent=43 // pred_check
        %p1554 = pneg %p163
      $region62: #{tpu_custom_call.1} parent=43 // pred_check_branch
        %1556 = sbr.rel (%p1554) target = $region64
      $region63: #{tpu_custom_call.1} parent=43 // pred_region
        _
      $region64: #{tpu_custom_call.1} parent=43 // pred_fallthru
        _
      // Predicated region
      $region65: #{tpu_custom_call.1} parent=43 // pred_check
        %p1557 = pneg %p184
      $region66: #{tpu_custom_call.1} parent=43 // pred_check_branch
        %1559 = sbr.rel (%p1557) target = $region68
      $region67: #{tpu_custom_call.1} parent=43 // pred_region
        _
      $region68: #{tpu_custom_call.1} parent=43 // pred_fallthru
        _
    $region44: #{tpu_custom_call.1} parent=5 // pred_fallthru
      _
    %p1560 = scmp.le.s32.totalorder 2, %s14
    // Predicated region
    $region69: #{tpu_custom_call.1} parent=5 // pred_check
      %p1561 = pneg %p1560
    $region70: #{tpu_custom_call.1} parent=5 // pred_check_branch
      %1563 = sbr.rel (%p1561) target = $region72
    $region71: #{tpu_custom_call.1} parent=5 // pred_region
      %s1564 = ssub.s32 %s14, 2
    $region72: #{tpu_custom_call.1} parent=5 // pred_fallthru
      _
  $region6: #{tpu_custom_call.1} parent=0 // loop_footer
    %s18 = sadd.s32 1, %s14
  $region7: #{tpu_custom_call.1} parent=0 // loop_footer_branch
    %13 = sbr.rel target = $region3
  $region8: #{tpu_custom_call.1} parent=0 // loop_exit
    _

</llo_original>
